<compile_context>
chip_gen: v6e
topology: v6e:2x2x1
jax: 0.10.0
libtpu: 0.0.40
codegen_flags: <defaults>
</compile_context>

<pallas_src>
import math

import jax
import jax.numpy as jnp
from jax.experimental import pallas as pl
from jax.experimental.pallas import tpu as pltpu


# ----------------------------- in-kernel helpers -----------------------------

def _erf(x):
  # Abramowitz & Stegun 7.1.26 (|err| <= 1.5e-7); avoids relying on an erf
  # primitive lowering inside Mosaic.
  p = 0.3275911
  a1, a2, a3, a4, a5 = 0.254829592, -0.284496736, 1.421413741, -1.453152027, 1.061405429
  sign = jnp.where(x >= 0.0, 1.0, -1.0)
  ax = jnp.abs(x)
  t = 1.0 / (1.0 + p * ax)
  poly = ((((a5 * t + a4) * t + a3) * t + a2) * t + a1) * t
  return sign * (1.0 - poly * jnp.exp(-ax * ax))


def _gelu_exact(x):
  # torch nn.GELU() default ('none'): 0.5 * x * (1 + erf(x / sqrt(2)))
  return 0.5 * x * (1.0 + _erf(x * 0.7071067811865476))


def _layer_norm(x, gamma, beta, eps=1e-5):
  mu = jnp.mean(x, axis=-1, keepdims=True)
  var = jnp.mean((x - mu) ** 2, axis=-1, keepdims=True)
  return (x - mu) * jax.lax.rsqrt(var + eps) * gamma + beta


# --------------------------------- kernel ------------------------------------

def _make_bert_kernel(bt, s_len, num_heads, d_out):
  """bt: batch elements per grid step; s_len: sequence length; d_out: per-head dim."""
  # torch: scores / query.size(1)**0.5 with query (B, S, Do) -> scale = sqrt(S)
  inv_scale = 1.0 / math.sqrt(float(s_len))
  f32, bf16 = jnp.float32, jnp.bfloat16

  def kernel(emb_ref, mask_ref, wqkv_ref, bqkv_ref, mha_w_ref,
             ff_w1_ref, ff_b1_ref, ff_w2_ref, tok_w_ref, tok_b_ref, dvec_ref,
             out_ref):
    rows = emb_ref.shape[0]                  # bt * s_len
    hdo = num_heads * d_out

    # Fused (fusion -> q/k) + v projection: one lane-dense K=128 bf16 matmul
    # with f32 accumulation.  Per-position bias carries the positional-encoding
    # fusion term plus the fusion/q/k/v biases (precomposed in the wrapper).
    qkv = jnp.dot(emb_ref[...].astype(bf16), wqkv_ref[...],
                  preferred_element_type=f32)                      # (rows, 3*HDo)
    qkv3 = qkv.reshape(bt, s_len, 3 * hdo) + bqkv_ref[...]          # + (S, 3*HDo)

    q = qkv3[:, :, :hdo]                     # 128-lane-aligned slices
    k = qkv3[:, :, hdo:2 * hdo]
    v = qkv3[:, :, 2 * hdo:]

    def split_heads(t):   # (bt, S, H*Do) -> (H*bt, S, Do), head-major batch
      return jnp.concatenate(
          [t[:, :, h * d_out:(h + 1) * d_out] for h in range(num_heads)],
          axis=0).astype(bf16)

    qh, kh, vh = split_heads(q), split_heads(k), split_heads(v)

    # Head-batched attention: two batched einsums over the (H*bt) batch axis.
    s = jnp.einsum('bqd,bkd->bqk', qh, kh, preferred_element_type=f32)
    s = s * inv_scale + jnp.concatenate([mask_ref[...]] * num_heads, axis=0)
    m = jnp.max(s, axis=-1, keepdims=True)
    e = jnp.exp(s - m)
    p = e * pl.reciprocal(jnp.sum(e, axis=-1, keepdims=True), approx=True)
    ctx = jnp.einsum('bqk,bkd->bqd', p.astype(bf16), vh,
                     preferred_element_type=f32)                   # (H*bt, S, Do)
    ctx = jnp.concatenate(
        [ctx[h * bt:(h + 1) * bt] for h in range(num_heads)],
        axis=-1).reshape(rows, hdo)                                # (rows, HDo)

    dv = dvec_ref[...]   # (6, D) f32: [mha_b, mha_g, mha_be, ff_b2, ff_g, ff_be]
    mha = jnp.dot(ctx.astype(bf16), mha_w_ref[...],
                  preferred_element_type=f32) + dv[0:1]
    mha = _layer_norm(mha, dv[1:2], dv[2:3])

    # feed_forward: Linear -> Dropout(identity) -> GELU -> Linear -> Dropout(identity)
    h1 = jnp.dot(mha.astype(bf16), ff_w1_ref[...],
                 preferred_element_type=f32) + ff_b1_ref[...]
    h1 = _gelu_exact(h1)
    h2 = jnp.dot(h1.astype(bf16), ff_w2_ref[...],
                 preferred_element_type=f32) + dv[3:4]
    enc = _layer_norm(h2, dv[4:5], dv[5:6])   # note: no residual in the reference

    # token prediction + LogSoftmax.  tok_b carries -1e30 in padded vocab lanes,
    # so padded logits contribute exp(...) == 0 to the normalizer.
    logits = jnp.dot(enc.astype(bf16), tok_w_ref[...],
                     preferred_element_type=f32) + tok_b_ref[...]
    lmax = jnp.max(logits, axis=-1, keepdims=True)
    lse = jnp.log(jnp.sum(jnp.exp(logits - lmax), axis=-1, keepdims=True))
    out_ref[...] = logits - lmax - lse

  return kernel


# --------------------------- wrapper / JAX glue -------------------------------

def _choose_bt(batch, seq):
  """Rows-per-step: keep bt*S a multiple of 8 (sublane-aligned, no full-batch
  fallback), target ~256 rows per step (v6e MXU M-fill / step-overhead
  amortization), and keep >= 2 parallel grid steps when B allows (v7x: 2 TCs)."""
  sub = 8 // math.gcd(seq, 8)                   # bt must be a multiple of this
  cands = [d for d in range(1, batch + 1) if batch % d == 0 and d % sub == 0]
  if not cands:
    return batch                                # full block fallback (always legal)
  target = max(1, 256 // seq)
  multi = [d for d in cands if batch // d >= 2]
  pool = multi if multi else cands
  under = [d for d in pool if d <= target]
  return max(under) if under else min(pool)


def bert_forward(input_ids, attention_mask, time_tensor, poi_ids, params):
  """BERT.forward. Embedding gathers / positional encodings are JAX glue; the
  encoder + token-prediction + log-softmax run inside the Pallas kernel."""
  f32, bf16 = jnp.float32, jnp.bfloat16
  spatial_emb = params["spatial_emb"]
  B, S = input_ids.shape
  D = spatial_emb.shape[1]
  H = params["fus_w"].shape[0]
  Do = params["qw"].shape[2]
  V = params["tok_w"].shape[1]
  HD, HDo = H * D, H * Do
  Vp = ((V + 127) // 128) * 128              # lane-dense output store

  # -------- JointEmbedding (JAX glue) --------
  def emb_norm(x):  # JointEmbedding.norm (default weight=1, bias=0)
    mu = jnp.mean(x, axis=-1, keepdims=True)
    var = jnp.mean((x - mu) ** 2, axis=-1, keepdims=True)
    return (x - mu) / jnp.sqrt(var + 1e-5)

  # attention_position — identical across batch, computed once unbatched (S, D)
  pos = jnp.arange(S, dtype=f32)[:, None]
  d = 2.0 * jnp.arange(D, dtype=f32) / D
  p = pos / (10000.0 ** d)
  p = jnp.where((jnp.arange(D) % 2) == 0, jnp.sin(p), jnp.cos(p))
  pos_n = emb_norm(p)                                           # (S, D)

  # TemporalEncoding
  te = math.sqrt(1.0 / D) * jnp.cos(
      time_tensor[..., None] * params["time_w"] + params["time_b"])

  # four batched embedding streams packed lane-dense into (B*S, 4*D)
  pure_n = emb_norm(spatial_emb[input_ids])                     # norm(spatial_emb(x))
  time_n = emb_norm(te)
  s_n = emb_norm(params["s_emb"][input_ids])                    # norm(s_emb(x))
  poi_n = emb_norm(params["poi_emb"][poi_ids])
  emb_packed = jnp.concatenate([pure_n, time_n, s_n, poi_n],
                               axis=-1).reshape(B * S, 4 * D)   # f32; bf16 at the dot

  # additive mask: True (masked) -> -1e9 (same effect as masked_fill after softmax)
  mask_add = attention_mask.astype(f32) * (-1e9)                # (B, S, S)

  # -------- weight precomposition / packing (f32; cast to bf16 at the end) --------
  # fusion: (H, 5D, D) -> 5 slices of (D, H*D); slice i multiplies input stream i
  # (cat order in the reference: [input, pos, time, s_emb, poi]).
  fw = params["fus_w"].reshape(H, 5, D, D)
  fw = jnp.transpose(fw, (1, 2, 0, 3)).reshape(5, D, HD)
  fb = params["fus_b"].reshape(1, HD)

  def block_diag(ws):  # (H, Din, Dout) -> (H*Din, H*Dout) block-diagonal
    Hh, Din, Dout = ws.shape
    eye = jnp.eye(Hh, dtype=ws.dtype)
    return jnp.einsum('hij,hg->higj', ws, eye).reshape(Hh * Din, Hh * Dout)

  qkw = jnp.concatenate([block_diag(params["qw"]),
                         block_diag(params["kw"])], axis=1)      # (HD, 2*HDo)
  qkb_raw = jnp.concatenate([params["qb"].reshape(1, HDo),
                             params["kb"].reshape(1, HDo)], axis=1)

  # fusion(streams [x, time, s, poi]) composed straight through q/k: a dense
  # (4D, 2*HDo) matrix — no block-diagonal zeros left for the MXU.
  fw_main = jnp.concatenate([fw[0], fw[2], fw[3], fw[4]], axis=0)   # (4D, HD)
  w_qk = jnp.dot(fw_main, qkw)                                      # (4D, 2*HDo)

  # per-position q/k offset: (fusion bias + positional fusion term) through q/k
  pos_pre = jnp.dot(pos_n, fw[1])                                   # (S, HD)
  qk_off = jnp.dot(fb + pos_pre, qkw) + qkb_raw                     # (S, 2*HDo)

  # v is computed from the pure (spatial) embedding only -> zero rows for the
  # other three streams so it can share the same packed matmul.
  vw_p = jnp.transpose(params["vw"], (1, 0, 2)).reshape(D, HDo)
  w_v = jnp.concatenate([vw_p, jnp.zeros((3 * D, HDo), f32)], axis=0)  # (4D, HDo)
  v_off = jnp.broadcast_to(params["vb"].reshape(1, HDo), (S, HDo))

  w_qkv = jnp.concatenate([w_qk, w_v], axis=1).astype(bf16)        # (4D, 3*HDo) bf16
  b_qkv = jnp.concatenate([qk_off, v_off], axis=1)                 # (S, 3*HDo) f32

  mha_w = params["mha_w"].astype(bf16)                             # (HDo, D)
  ff_w1 = params["ff_w1"].astype(bf16)                             # (D, Do)
  ff_w2 = params["ff_w2"].astype(bf16)                             # (Do, D)
  dvec = jnp.concatenate([params["mha_b"], params["mha_g"], params["mha_be"],
                          params["ff_b2"], params["ff_g"], params["ff_be"]],
                         axis=0)                                   # (6, D) f32

  tok_w_p = jnp.pad(params["tok_w"], ((0, 0), (0, Vp - V))).astype(bf16)
  if Vp > V:
    tok_b_p = jnp.concatenate(
        [params["tok_b"], jnp.full((1, Vp - V), -1e30, f32)], axis=1)
  else:
    tok_b_p = params["tok_b"]

  weights = (w_qkv, b_qkv, mha_w, ff_w1, params["ff_b1"], ff_w2,
             tok_w_p, tok_b_p, dvec)

  # -------- grid / block selection --------
  bt = _choose_bt(B, S)
  grid = (B // bt,)
  Rb = bt * S

  emb_spec = pl.BlockSpec((Rb, 4 * D), lambda b: (b, 0))
  mask_spec = pl.BlockSpec((bt, S, S), lambda b: (b, 0, 0))

  def full_spec(a):  # constant-index full-array block (weights/biases)
    return pl.BlockSpec(a.shape, lambda b, n=a.ndim: (0,) * n)

  in_specs = [emb_spec, mask_spec] + [full_spec(w) for w in weights]
  out_spec = pl.BlockSpec((Rb, Vp), lambda b: (b, 0))

  kernel = _make_bert_kernel(bt, S, H, Do)

  out = pl.pallas_call(
      kernel,
      out_shape=jax.ShapeDtypeStruct((B * S, Vp), jnp.float32),
      grid_spec=pltpu.PrefetchScalarGridSpec(
          num_scalar_prefetch=0,
          grid=grid,
          in_specs=in_specs,
          out_specs=out_spec),
      compiler_params=pltpu.CompilerParams(
          dimension_semantics=("parallel",),
          vmem_limit_bytes=32 * 1024 * 1024),
  )(emb_packed, mask_add, *weights)

  return out[:, :V].reshape(B, S, V)


# ------------------------------ parameter init --------------------------------

def init_params(key, vocab_size, dim_inp, dim_out, num_heads, poi_size):
  D, Do, H, V, P = dim_inp, dim_out, num_heads, vocab_size, poi_size
  keys = list(jax.random.split(key, 32))
  it = iter(keys)

  def linear(k, fan_in, fan_out):
    # PyTorch nn.Linear default init: U(-1/sqrt(fan_in), 1/sqrt(fan_in))
    lim = 1.0 / math.sqrt(fan_in)
    kw, kb = jax.random.split(k)
    w = jax.random.uniform(kw, (fan_in, fan_out), jnp.float32, -lim, lim)
    b = jax.random.uniform(kb, (fan_out,), jnp.float32, -lim, lim)
    return w, b

  fus_w, fus_b, qw, qb, kw_, kb_, vw, vb = [], [], [], [], [], [], [], []
  for _ in range(H):
    w, b = linear(next(it), 5 * D, D); fus_w.append(w); fus_b.append(b[None, :])
    w, b = linear(next(it), D, Do);    qw.append(w);    qb.append(b[None, :])
    w, b = linear(next(it), D, Do);    kw_.append(w);   kb_.append(b[None, :])
    w, b = linear(next(it), D, Do);    vw.append(w);    vb.append(b[None, :])

  mha_w, mha_b = linear(next(it), H * Do, D)
  ff_w1, ff_b1 = linear(next(it), D, Do)
  ff_w2, ff_b2 = linear(next(it), Do, D)
  tok_w, tok_b = linear(next(it), D, V)

  # TODO(synk): original s_emb is loaded from a gensim Word2Vec checkpoint (512-dim
  # vectors + 5 zero rows); replaced with a deterministic random table of width D.
  s_emb = jax.random.normal(next(it), (V + 5, D), jnp.float32)
  spatial_emb = jax.random.normal(next(it), (V, D), jnp.float32)
  poi_emb = jax.random.normal(next(it), (P, D), jnp.float32)

  params = dict(
      fus_w=jnp.stack(fus_w), fus_b=jnp.stack(fus_b),
      qw=jnp.stack(qw), qb=jnp.stack(qb),
      kw=jnp.stack(kw_), kb=jnp.stack(kb_),
      vw=jnp.stack(vw), vb=jnp.stack(vb),
      mha_w=mha_w, mha_b=mha_b[None, :],
      mha_g=jnp.ones((1, D), jnp.float32), mha_be=jnp.zeros((1, D), jnp.float32),
      ff_w1=ff_w1, ff_b1=ff_b1[None, :],
      ff_w2=ff_w2, ff_b2=ff_b2[None, :],
      ff_g=jnp.ones((1, D), jnp.float32), ff_be=jnp.zeros((1, D), jnp.float32),
      tok_w=tok_w, tok_b=tok_b[None, :],
      s_emb=s_emb, spatial_emb=spatial_emb, poi_emb=poi_emb,
      time_w=(1.0 / 10.0 ** jnp.linspace(0.0, 9.0, D)).astype(jnp.float32),
      time_b=jnp.zeros((D,), jnp.float32),
  )
  return params


if __name__ == "__main__":
  B, S = 2, 8
  D, Do, H = 32, 32, 4      # dim_inp, dim_out, attention_heads
  V, P = 64, 100            # vocab_size, poi_size

  key = jax.random.PRNGKey(0)
  k1, k2, k3, k4, kp = jax.random.split(key, 5)
  input_ids = jax.random.randint(k1, (B, S), 0, V)
  poi_ids = jax.random.randint(k2, (B, S), 0, P)
  time_tensor = jax.random.uniform(k3, (B, S), jnp.float32, 0.0, 100.0)
  attention_mask = jax.random.bernoulli(k4, 0.2, (B, S, S))   # True == masked position

  params = init_params(kp, V, D, Do, H, P)

  out = bert_forward(input_ids, attention_mask, time_tensor, poi_ids, params)
  out = jax.block_until_ready(out)
  assert out.shape == (B, S, V) and out.dtype == jnp.float32
  # log-probabilities should (approximately) normalize
  assert bool(jnp.all(jnp.abs(jax.scipy.special.logsumexp(out, axis=-1)) < 1e-3))
  print("KERNEL_OK")
</pallas_src>

<mosaic_0001>
module attributes {stable_mosaic.version = 11 : i64} {
  func.func @kernel(%arg0: i32, %arg1: memref<8x128xf32, #tpu.memory_space<vmem>>, %arg2: memref<1x8x8xf32, #tpu.memory_space<vmem>>, %arg3: memref<128x384xbf16, #tpu.memory_space<vmem>>, %arg4: memref<8x384xf32, #tpu.memory_space<vmem>>, %arg5: memref<128x32xbf16, #tpu.memory_space<vmem>>, %arg6: memref<32x32xbf16, #tpu.memory_space<vmem>>, %arg7: memref<1x32xf32, #tpu.memory_space<vmem>>, %arg8: memref<32x32xbf16, #tpu.memory_space<vmem>>, %arg9: memref<32x128xbf16, #tpu.memory_space<vmem>>, %arg10: memref<1x128xf32, #tpu.memory_space<vmem>>, %arg11: memref<6x32xf32, #tpu.memory_space<vmem>>, %arg12: memref<8x128xf32, #tpu.memory_space<vmem>>) attributes {dimension_semantics = [#tpu.dimension_semantics<parallel>], iteration_bounds = array<i64: 2>, scalar_prefetch = 0 : i64, scratch_operands = 0 : i64, tpu.core_type = #tpu.core_type<tc>, window_params = [{transform_indices = @transform_0, window_bounds = array<i64: 8, 128>}, {transform_indices = @transform_1, window_bounds = array<i64: 1, 8, 8>}, {pipeline_mode = #tpu.pipeline_mode<synchronous>, transform_indices = @transform_2, window_bounds = array<i64: 128, 384>}, {pipeline_mode = #tpu.pipeline_mode<synchronous>, transform_indices = @transform_3, window_bounds = array<i64: 8, 384>}, {pipeline_mode = #tpu.pipeline_mode<synchronous>, transform_indices = @transform_4, window_bounds = array<i64: 128, 32>}, {pipeline_mode = #tpu.pipeline_mode<synchronous>, transform_indices = @transform_5, window_bounds = array<i64: 32, 32>}, {pipeline_mode = #tpu.pipeline_mode<synchronous>, transform_indices = @transform_6, window_bounds = array<i64: 1, 32>}, {pipeline_mode = #tpu.pipeline_mode<synchronous>, transform_indices = @transform_7, window_bounds = array<i64: 32, 32>}, {pipeline_mode = #tpu.pipeline_mode<synchronous>, transform_indices = @transform_8, window_bounds = array<i64: 32, 128>}, {pipeline_mode = #tpu.pipeline_mode<synchronous>, transform_indices = @transform_9, window_bounds = array<i64: 1, 128>}, {pipeline_mode = #tpu.pipeline_mode<synchronous>, transform_indices = @transform_10, window_bounds = array<i64: 6, 32>}, {transform_indices = @transform_11, window_bounds = array<i64: 8, 128>}]} {
    %c0 = arith.constant 0 : index
    %c0_0 = arith.constant 0 : index
    %0 = vector.load %arg1[%c0, %c0_0] : memref<8x128xf32, #tpu.memory_space<vmem>>, vector<8x128xf32>
    %1 = arith.truncf %0 : vector<8x128xf32> to vector<8x128xbf16>
    %c0_1 = arith.constant 0 : index
    %c0_2 = arith.constant 0 : index
    %2 = vector.load %arg3[%c0_1, %c0_2] : memref<128x384xbf16, #tpu.memory_space<vmem>>, vector<128x384xbf16>
    %cst = arith.constant dense<0.000000e+00> : vector<8x384xf32>
    %3 = tpu.matmul %1, %2, %cst {dimension_numbers = #tpu.dot_dimension_numbers<[1], [0], [0], [1], [0, 0, 1, 1], [], []>} : vector<8x128xbf16>, vector<128x384xbf16>, vector<8x384xf32> -> vector<8x384xf32>
    %4 = vector.shape_cast %3 : vector<8x384xf32> to vector<1x8x384xf32>
    %c0_3 = arith.constant 0 : index
    %c0_4 = arith.constant 0 : index
    %5 = vector.load %arg4[%c0_3, %c0_4] : memref<8x384xf32, #tpu.memory_space<vmem>>, vector<8x384xf32>
    %6 = vector.shape_cast %5 : vector<8x384xf32> to vector<1x8x384xf32>
    %7 = arith.addf %4, %6 : vector<1x8x384xf32>
    %8 = vector.extract_strided_slice %7 {offsets = [0, 0, 0], sizes = [1, 8, 128], strides = [1, 1, 1]} : vector<1x8x384xf32> to vector<1x8x128xf32>
    %9 = vector.extract_strided_slice %7 {offsets = [0, 0, 128], sizes = [1, 8, 128], strides = [1, 1, 1]} : vector<1x8x384xf32> to vector<1x8x128xf32>
    %10 = vector.extract_strided_slice %7 {offsets = [0, 0, 256], sizes = [1, 8, 128], strides = [1, 1, 1]} : vector<1x8x384xf32> to vector<1x8x128xf32>
    %11 = vector.extract_strided_slice %8 {offsets = [0, 0, 0], sizes = [1, 8, 32], strides = [1, 1, 1]} : vector<1x8x128xf32> to vector<1x8x32xf32>
    %12 = vector.extract_strided_slice %8 {offsets = [0, 0, 32], sizes = [1, 8, 32], strides = [1, 1, 1]} : vector<1x8x128xf32> to vector<1x8x32xf32>
    %13 = vector.extract_strided_slice %8 {offsets = [0, 0, 64], sizes = [1, 8, 32], strides = [1, 1, 1]} : vector<1x8x128xf32> to vector<1x8x32xf32>
    %14 = vector.extract_strided_slice %8 {offsets = [0, 0, 96], sizes = [1, 8, 32], strides = [1, 1, 1]} : vector<1x8x128xf32> to vector<1x8x32xf32>
    %15 = tpu.concatenate %11, %12, %13, %14 in 0 : vector<1x8x32xf32>, vector<1x8x32xf32>, vector<1x8x32xf32>, vector<1x8x32xf32> -> vector<4x8x32xf32>
    %16 = arith.truncf %15 : vector<4x8x32xf32> to vector<4x8x32xbf16>
    %17 = vector.extract_strided_slice %9 {offsets = [0, 0, 0], sizes = [1, 8, 32], strides = [1, 1, 1]} : vector<1x8x128xf32> to vector<1x8x32xf32>
    %18 = vector.extract_strided_slice %9 {offsets = [0, 0, 32], sizes = [1, 8, 32], strides = [1, 1, 1]} : vector<1x8x128xf32> to vector<1x8x32xf32>
    %19 = vector.extract_strided_slice %9 {offsets = [0, 0, 64], sizes = [1, 8, 32], strides = [1, 1, 1]} : vector<1x8x128xf32> to vector<1x8x32xf32>
    %20 = vector.extract_strided_slice %9 {offsets = [0, 0, 96], sizes = [1, 8, 32], strides = [1, 1, 1]} : vector<1x8x128xf32> to vector<1x8x32xf32>
    %21 = tpu.concatenate %17, %18, %19, %20 in 0 : vector<1x8x32xf32>, vector<1x8x32xf32>, vector<1x8x32xf32>, vector<1x8x32xf32> -> vector<4x8x32xf32>
    %22 = arith.truncf %21 : vector<4x8x32xf32> to vector<4x8x32xbf16>
    %23 = vector.extract_strided_slice %10 {offsets = [0, 0, 0], sizes = [1, 8, 32], strides = [1, 1, 1]} : vector<1x8x128xf32> to vector<1x8x32xf32>
    %24 = vector.extract_strided_slice %10 {offsets = [0, 0, 32], sizes = [1, 8, 32], strides = [1, 1, 1]} : vector<1x8x128xf32> to vector<1x8x32xf32>
    %25 = vector.extract_strided_slice %10 {offsets = [0, 0, 64], sizes = [1, 8, 32], strides = [1, 1, 1]} : vector<1x8x128xf32> to vector<1x8x32xf32>
    %26 = vector.extract_strided_slice %10 {offsets = [0, 0, 96], sizes = [1, 8, 32], strides = [1, 1, 1]} : vector<1x8x128xf32> to vector<1x8x32xf32>
    %27 = tpu.concatenate %23, %24, %25, %26 in 0 : vector<1x8x32xf32>, vector<1x8x32xf32>, vector<1x8x32xf32>, vector<1x8x32xf32> -> vector<4x8x32xf32>
    %28 = arith.truncf %27 : vector<4x8x32xf32> to vector<4x8x32xbf16>
    "tpu.trace_start"() <{level = 10 : i32, message = "bqd,bkd->bqk"}> : () -> ()
    %cst_5 = arith.constant dense<0.000000e+00> : vector<4x8x8xf32>
    %29 = tpu.matmul %16, %22, %cst_5 {dimension_numbers = #tpu.dot_dimension_numbers<[2], [2], [1], [1], [0, 0, 0, 1, 1, 1], [0], [0]>} : vector<4x8x32xbf16>, vector<4x8x32xbf16>, vector<4x8x8xf32> -> vector<4x8x8xf32>
    "tpu.trace_stop"() : () -> ()
    %cst_6 = arith.constant 0.353553385 : f32
    %30 = vector.broadcast %cst_6 : f32 to vector<4x8x8xf32>
    %31 = arith.mulf %29, %30 : vector<4x8x8xf32>
    %c0_7 = arith.constant 0 : index
    %c0_8 = arith.constant 0 : index
    %c0_9 = arith.constant 0 : index
    %32 = vector.load %arg2[%c0_7, %c0_8, %c0_9] : memref<1x8x8xf32, #tpu.memory_space<vmem>>, vector<1x8x8xf32>
    %33 = tpu.concatenate %32, %32, %32, %32 in 0 : vector<1x8x8xf32>, vector<1x8x8xf32>, vector<1x8x8xf32>, vector<1x8x8xf32> -> vector<4x8x8xf32>
    %34 = arith.addf %31, %33 : vector<4x8x8xf32>
    %cst_10 = arith.constant dense<0xFF800000> : vector<4x8xf32>
    %35 = vector.multi_reduction <maximumf>, %34, %cst_10 [2] : vector<4x8x8xf32> to vector<4x8xf32>
    %36 = vector.shape_cast %35 : vector<4x8xf32> to vector<4x8x1xf32>
    %37 = vector.broadcast %36 : vector<4x8x1xf32> to vector<4x8x8xf32>
    %38 = arith.subf %34, %37 : vector<4x8x8xf32>
    %39 = math.exp %38 : vector<4x8x8xf32>
    %cst_11 = arith.constant dense<0.000000e+00> : vector<4x8xf32>
    %40 = vector.multi_reduction <add>, %39, %cst_11 [2] : vector<4x8x8xf32> to vector<4x8xf32>
    %41 = vector.shape_cast %40 : vector<4x8xf32> to vector<4x8x1xf32>
    %42 = tpu.reciprocal %41 {approx = true} : vector<4x8x1xf32> -> vector<4x8x1xf32>
    %43 = vector.broadcast %42 : vector<4x8x1xf32> to vector<4x8x8xf32>
    %44 = arith.mulf %39, %43 : vector<4x8x8xf32>
    %45 = arith.truncf %44 : vector<4x8x8xf32> to vector<4x8x8xbf16>
    "tpu.trace_start"() <{level = 10 : i32, message = "bqk,bkd->bqd"}> : () -> ()
    %cst_12 = arith.constant dense<0.000000e+00> : vector<4x8x32xf32>
    %46 = tpu.matmul %45, %28, %cst_12 {dimension_numbers = #tpu.dot_dimension_numbers<[2], [1], [1], [2], [0, 0, 0, 1, 1, 2], [0], [0]>} : vector<4x8x8xbf16>, vector<4x8x32xbf16>, vector<4x8x32xf32> -> vector<4x8x32xf32>
    "tpu.trace_stop"() : () -> ()
    %47 = vector.extract_strided_slice %46 {offsets = [0, 0, 0], sizes = [1, 8, 32], strides = [1, 1, 1]} : vector<4x8x32xf32> to vector<1x8x32xf32>
    %48 = vector.extract_strided_slice %46 {offsets = [1, 0, 0], sizes = [1, 8, 32], strides = [1, 1, 1]} : vector<4x8x32xf32> to vector<1x8x32xf32>
    %49 = vector.extract_strided_slice %46 {offsets = [2, 0, 0], sizes = [1, 8, 32], strides = [1, 1, 1]} : vector<4x8x32xf32> to vector<1x8x32xf32>
    %50 = vector.extract_strided_slice %46 {offsets = [3, 0, 0], sizes = [1, 8, 32], strides = [1, 1, 1]} : vector<4x8x32xf32> to vector<1x8x32xf32>
    %51 = tpu.concatenate %47, %48, %49, %50 in 2 : vector<1x8x32xf32>, vector<1x8x32xf32>, vector<1x8x32xf32>, vector<1x8x32xf32> -> vector<1x8x128xf32>
    %52 = vector.shape_cast %51 : vector<1x8x128xf32> to vector<8x128xf32>
    %c0_13 = arith.constant 0 : index
    %c0_14 = arith.constant 0 : index
    %53 = vector.load %arg11[%c0_13, %c0_14] : memref<6x32xf32, #tpu.memory_space<vmem>>, vector<6x32xf32>
    %54 = arith.truncf %52 : vector<8x128xf32> to vector<8x128xbf16>
    %c0_15 = arith.constant 0 : index
    %c0_16 = arith.constant 0 : index
    %55 = vector.load %arg5[%c0_15, %c0_16] : memref<128x32xbf16, #tpu.memory_space<vmem>>, vector<128x32xbf16>
    %cst_17 = arith.constant dense<0.000000e+00> : vector<8x32xf32>
    %56 = tpu.matmul %54, %55, %cst_17 {dimension_numbers = #tpu.dot_dimension_numbers<[1], [0], [0], [1], [0, 0, 1, 1], [], []>} : vector<8x128xbf16>, vector<128x32xbf16>, vector<8x32xf32> -> vector<8x32xf32>
    %57 = vector.extract_strided_slice %53 {offsets = [0, 0], sizes = [1, 32], strides = [1, 1]} : vector<6x32xf32> to vector<1x32xf32>
    %58 = vector.broadcast %57 : vector<1x32xf32> to vector<8x32xf32>
    %59 = arith.addf %56, %58 : vector<8x32xf32>
    %60 = vector.extract_strided_slice %53 {offsets = [1, 0], sizes = [1, 32], strides = [1, 1]} : vector<6x32xf32> to vector<1x32xf32>
    %61 = vector.extract_strided_slice %53 {offsets = [2, 0], sizes = [1, 32], strides = [1, 1]} : vector<6x32xf32> to vector<1x32xf32>
    %cst_18 = arith.constant dense<0.000000e+00> : vector<8xf32>
    %62 = vector.multi_reduction <add>, %59, %cst_18 [1] : vector<8x32xf32> to vector<8xf32>
    %63 = vector.shape_cast %62 : vector<8xf32> to vector<8x1xf32>
    %cst_19 = arith.constant 3.200000e+01 : f32
    %64 = vector.broadcast %cst_19 : f32 to vector<8x1xf32>
    %65 = arith.divf %63, %64 : vector<8x1xf32>
    %66 = vector.broadcast %65 : vector<8x1xf32> to vector<8x32xf32>
    %67 = arith.subf %59, %66 : vector<8x32xf32>
    %68 = arith.mulf %67, %67 : vector<8x32xf32>
    %cst_20 = arith.constant dense<0.000000e+00> : vector<8xf32>
    %69 = vector.multi_reduction <add>, %68, %cst_20 [1] : vector<8x32xf32> to vector<8xf32>
    %70 = vector.shape_cast %69 : vector<8xf32> to vector<8x1xf32>
    %cst_21 = arith.constant 3.200000e+01 : f32
    %71 = vector.broadcast %cst_21 : f32 to vector<8x1xf32>
    %72 = arith.divf %70, %71 : vector<8x1xf32>
    %73 = vector.broadcast %65 : vector<8x1xf32> to vector<8x32xf32>
    %74 = arith.subf %59, %73 : vector<8x32xf32>
    %cst_22 = arith.constant 9.99999974E-6 : f32
    %75 = vector.broadcast %cst_22 : f32 to vector<8x1xf32>
    %76 = arith.addf %72, %75 : vector<8x1xf32>
    %77 = math.rsqrt %76 : vector<8x1xf32>
    %78 = vector.broadcast %77 : vector<8x1xf32> to vector<8x32xf32>
    %79 = arith.mulf %74, %78 : vector<8x32xf32>
    %80 = vector.broadcast %60 : vector<1x32xf32> to vector<8x32xf32>
    %81 = arith.mulf %79, %80 : vector<8x32xf32>
    %82 = vector.broadcast %61 : vector<1x32xf32> to vector<8x32xf32>
    %83 = arith.addf %81, %82 : vector<8x32xf32>
    %84 = arith.truncf %83 : vector<8x32xf32> to vector<8x32xbf16>
    %c0_23 = arith.constant 0 : index
    %c0_24 = arith.constant 0 : index
    %85 = vector.load %arg6[%c0_23, %c0_24] : memref<32x32xbf16, #tpu.memory_space<vmem>>, vector<32x32xbf16>
    %cst_25 = arith.constant dense<0.000000e+00> : vector<8x32xf32>
    %86 = tpu.matmul %84, %85, %cst_25 {dimension_numbers = #tpu.dot_dimension_numbers<[1], [0], [0], [1], [0, 0, 1, 1], [], []>} : vector<8x32xbf16>, vector<32x32xbf16>, vector<8x32xf32> -> vector<8x32xf32>
    %c0_26 = arith.constant 0 : index
    %c0_27 = arith.constant 0 : index
    %87 = vector.load %arg7[%c0_26, %c0_27] : memref<1x32xf32, #tpu.memory_space<vmem>>, vector<1x32xf32>
    %88 = vector.broadcast %87 : vector<1x32xf32> to vector<8x32xf32>
    %89 = arith.addf %86, %88 : vector<8x32xf32>
    %cst_28 = arith.constant 5.000000e-01 : f32
    %90 = vector.broadcast %cst_28 : f32 to vector<8x32xf32>
    %91 = arith.mulf %90, %89 : vector<8x32xf32>
    %cst_29 = arith.constant 0.707106769 : f32
    %92 = vector.broadcast %cst_29 : f32 to vector<8x32xf32>
    %93 = arith.mulf %89, %92 : vector<8x32xf32>
    %cst_30 = arith.constant 0.000000e+00 : f32
    %94 = vector.broadcast %cst_30 : f32 to vector<8x32xf32>
    %95 = arith.cmpf oge, %93, %94 : vector<8x32xf32>
    %cst_31 = arith.constant 1.000000e+00 : f32
    %cst_32 = arith.constant -1.000000e+00 : f32
    %96 = vector.broadcast %cst_31 : f32 to vector<8x32xf32>
    %97 = vector.broadcast %cst_32 : f32 to vector<8x32xf32>
    %98 = arith.select %95, %96, %97 : vector<8x32xi1>, vector<8x32xf32>
    %99 = math.absf %93 : vector<8x32xf32>
    %cst_33 = arith.constant 0.327591091 : f32
    %100 = vector.broadcast %cst_33 : f32 to vector<8x32xf32>
    %101 = arith.mulf %100, %99 : vector<8x32xf32>
    %cst_34 = arith.constant 1.000000e+00 : f32
    %102 = vector.broadcast %cst_34 : f32 to vector<8x32xf32>
    %103 = arith.addf %102, %101 : vector<8x32xf32>
    %cst_35 = arith.constant 1.000000e+00 : f32
    %104 = vector.broadcast %cst_35 : f32 to vector<8x32xf32>
    %105 = arith.divf %104, %103 : vector<8x32xf32>
    %cst_36 = arith.constant 1.06140542 : f32
    %106 = vector.broadcast %cst_36 : f32 to vector<8x32xf32>
    %107 = arith.mulf %106, %105 : vector<8x32xf32>
    %cst_37 = arith.constant -1.45315206 : f32
    %108 = vector.broadcast %cst_37 : f32 to vector<8x32xf32>
    %109 = arith.addf %107, %108 : vector<8x32xf32>
    %110 = arith.mulf %109, %105 : vector<8x32xf32>
    %cst_38 = arith.constant 1.42141378 : f32
    %111 = vector.broadcast %cst_38 : f32 to vector<8x32xf32>
    %112 = arith.addf %110, %111 : vector<8x32xf32>
    %113 = arith.mulf %112, %105 : vector<8x32xf32>
    %cst_39 = arith.constant -0.284496725 : f32
    %114 = vector.broadcast %cst_39 : f32 to vector<8x32xf32>
    %115 = arith.addf %113, %114 : vector<8x32xf32>
    %116 = arith.mulf %115, %105 : vector<8x32xf32>
    %cst_40 = arith.constant 0.254829586 : f32
    %117 = vector.broadcast %cst_40 : f32 to vector<8x32xf32>
    %118 = arith.addf %116, %117 : vector<8x32xf32>
    %119 = arith.mulf %118, %105 : vector<8x32xf32>
    %cst_41 = arith.constant 0.000000e+00 : f32
    %120 = vector.broadcast %cst_41 : f32 to vector<8x32xf32>
    %121 = arith.subf %120, %99 : vector<8x32xf32>
    %122 = arith.mulf %121, %99 : vector<8x32xf32>
    %123 = math.exp %122 : vector<8x32xf32>
    %124 = arith.mulf %119, %123 : vector<8x32xf32>
    %cst_42 = arith.constant 1.000000e+00 : f32
    %125 = vector.broadcast %cst_42 : f32 to vector<8x32xf32>
    %126 = arith.subf %125, %124 : vector<8x32xf32>
    %127 = arith.mulf %98, %126 : vector<8x32xf32>
    %cst_43 = arith.constant 1.000000e+00 : f32
    %128 = vector.broadcast %cst_43 : f32 to vector<8x32xf32>
    %129 = arith.addf %128, %127 : vector<8x32xf32>
    %130 = arith.mulf %91, %129 : vector<8x32xf32>
    %131 = arith.truncf %130 : vector<8x32xf32> to vector<8x32xbf16>
    %c0_44 = arith.constant 0 : index
    %c0_45 = arith.constant 0 : index
    %132 = vector.load %arg8[%c0_44, %c0_45] : memref<32x32xbf16, #tpu.memory_space<vmem>>, vector<32x32xbf16>
    %cst_46 = arith.constant dense<0.000000e+00> : vector<8x32xf32>
    %133 = tpu.matmul %131, %132, %cst_46 {dimension_numbers = #tpu.dot_dimension_numbers<[1], [0], [0], [1], [0, 0, 1, 1], [], []>} : vector<8x32xbf16>, vector<32x32xbf16>, vector<8x32xf32> -> vector<8x32xf32>
    %134 = vector.extract_strided_slice %53 {offsets = [3, 0], sizes = [1, 32], strides = [1, 1]} : vector<6x32xf32> to vector<1x32xf32>
    %135 = vector.broadcast %134 : vector<1x32xf32> to vector<8x32xf32>
    %136 = arith.addf %133, %135 : vector<8x32xf32>
    %137 = vector.extract_strided_slice %53 {offsets = [4, 0], sizes = [1, 32], strides = [1, 1]} : vector<6x32xf32> to vector<1x32xf32>
    %138 = vector.extract_strided_slice %53 {offsets = [5, 0], sizes = [1, 32], strides = [1, 1]} : vector<6x32xf32> to vector<1x32xf32>
    %cst_47 = arith.constant dense<0.000000e+00> : vector<8xf32>
    %139 = vector.multi_reduction <add>, %136, %cst_47 [1] : vector<8x32xf32> to vector<8xf32>
    %140 = vector.shape_cast %139 : vector<8xf32> to vector<8x1xf32>
    %cst_48 = arith.constant 3.200000e+01 : f32
    %141 = vector.broadcast %cst_48 : f32 to vector<8x1xf32>
    %142 = arith.divf %140, %141 : vector<8x1xf32>
    %143 = vector.broadcast %142 : vector<8x1xf32> to vector<8x32xf32>
    %144 = arith.subf %136, %143 : vector<8x32xf32>
    %145 = arith.mulf %144, %144 : vector<8x32xf32>
    %cst_49 = arith.constant dense<0.000000e+00> : vector<8xf32>
    %146 = vector.multi_reduction <add>, %145, %cst_49 [1] : vector<8x32xf32> to vector<8xf32>
    %147 = vector.shape_cast %146 : vector<8xf32> to vector<8x1xf32>
    %cst_50 = arith.constant 3.200000e+01 : f32
    %148 = vector.broadcast %cst_50 : f32 to vector<8x1xf32>
    %149 = arith.divf %147, %148 : vector<8x1xf32>
    %150 = vector.broadcast %142 : vector<8x1xf32> to vector<8x32xf32>
    %151 = arith.subf %136, %150 : vector<8x32xf32>
    %cst_51 = arith.constant 9.99999974E-6 : f32
    %152 = vector.broadcast %cst_51 : f32 to vector<8x1xf32>
    %153 = arith.addf %149, %152 : vector<8x1xf32>
    %154 = math.rsqrt %153 : vector<8x1xf32>
    %155 = vector.broadcast %154 : vector<8x1xf32> to vector<8x32xf32>
    %156 = arith.mulf %151, %155 : vector<8x32xf32>
    %157 = vector.broadcast %137 : vector<1x32xf32> to vector<8x32xf32>
    %158 = arith.mulf %156, %157 : vector<8x32xf32>
    %159 = vector.broadcast %138 : vector<1x32xf32> to vector<8x32xf32>
    %160 = arith.addf %158, %159 : vector<8x32xf32>
    %161 = arith.truncf %160 : vector<8x32xf32> to vector<8x32xbf16>
    %c0_52 = arith.constant 0 : index
    %c0_53 = arith.constant 0 : index
    %162 = vector.load %arg9[%c0_52, %c0_53] : memref<32x128xbf16, #tpu.memory_space<vmem>>, vector<32x128xbf16>
    %cst_54 = arith.constant dense<0.000000e+00> : vector<8x128xf32>
    %163 = tpu.matmul %161, %162, %cst_54 {dimension_numbers = #tpu.dot_dimension_numbers<[1], [0], [0], [1], [0, 0, 1, 1], [], []>} : vector<8x32xbf16>, vector<32x128xbf16>, vector<8x128xf32> -> vector<8x128xf32>
    %c0_55 = arith.constant 0 : index
    %c0_56 = arith.constant 0 : index
    %164 = vector.load %arg10[%c0_55, %c0_56] : memref<1x128xf32, #tpu.memory_space<vmem>>, vector<1x128xf32>
    %165 = vector.broadcast %164 : vector<1x128xf32> to vector<8x128xf32>
    %166 = arith.addf %163, %165 : vector<8x128xf32>
    %cst_57 = arith.constant dense<0xFF800000> : vector<8xf32>
    %167 = vector.multi_reduction <maximumf>, %166, %cst_57 [1] : vector<8x128xf32> to vector<8xf32>
    %168 = vector.shape_cast %167 : vector<8xf32> to vector<8x1xf32>
    %169 = vector.broadcast %168 : vector<8x1xf32> to vector<8x128xf32>
    %170 = arith.subf %166, %169 : vector<8x128xf32>
    %171 = math.exp %170 : vector<8x128xf32>
    %cst_58 = arith.constant dense<0.000000e+00> : vector<8xf32>
    %172 = vector.multi_reduction <add>, %171, %cst_58 [1] : vector<8x128xf32> to vector<8xf32>
    %173 = vector.shape_cast %172 : vector<8xf32> to vector<8x1xf32>
    %174 = math.log %173 : vector<8x1xf32>
    %175 = vector.broadcast %168 : vector<8x1xf32> to vector<8x128xf32>
    %176 = arith.subf %166, %175 : vector<8x128xf32>
    %177 = vector.broadcast %174 : vector<8x1xf32> to vector<8x128xf32>
    %178 = arith.subf %176, %177 : vector<8x128xf32>
    %c0_59 = arith.constant 0 : index
    %c0_60 = arith.constant 0 : index
    %179 = vector.load %arg12[%c0_59, %c0_60] : memref<8x128xf32, #tpu.memory_space<vmem>>, vector<8x128xf32>
    tpu.vector_store %arg12[%c0_59, %c0_60], %178 {strides = array<i32>} : memref<8x128xf32, #tpu.memory_space<vmem>>, vector<8x128xf32>,
    return
  }
  func.func @transform_0(%arg0: i32) -> (i32, i32) {
    %c0_i32 = arith.constant 0 : i32
    %c0_i32_0 = arith.constant 0 : i32
    return %arg0, %c0_i32 : i32, i32
  }
  func.func @transform_1(%arg0: i32) -> (i32, i32, i32) {
    %c0_i32 = arith.constant 0 : i32
    %c0_i32_0 = arith.constant 0 : i32
    %c0_i32_1 = arith.constant 0 : i32
    return %arg0, %c0_i32, %c0_i32_0 : i32, i32, i32
  }
  func.func @transform_2(%arg0: i32) -> (i32, i32) {
    %c0_i32 = arith.constant 0 : i32
    %c0_i32_0 = arith.constant 0 : i32
    %c0_i32_1 = arith.constant 0 : i32
    return %c0_i32, %c0_i32_0 : i32, i32
  }
  func.func @transform_3(%arg0: i32) -> (i32, i32) {
    %c0_i32 = arith.constant 0 : i32
    %c0_i32_0 = arith.constant 0 : i32
    %c0_i32_1 = arith.constant 0 : i32
    return %c0_i32, %c0_i32_0 : i32, i32
  }
  func.func @transform_4(%arg0: i32) -> (i32, i32) {
    %c0_i32 = arith.constant 0 : i32
    %c0_i32_0 = arith.constant 0 : i32
    %c0_i32_1 = arith.constant 0 : i32
    return %c0_i32, %c0_i32_0 : i32, i32
  }
  func.func @transform_5(%arg0: i32) -> (i32, i32) {
    %c0_i32 = arith.constant 0 : i32
    %c0_i32_0 = arith.constant 0 : i32
    %c0_i32_1 = arith.constant 0 : i32
    return %c0_i32, %c0_i32_0 : i32, i32
  }
  func.func @transform_6(%arg0: i32) -> (i32, i32) {
    %c0_i32 = arith.constant 0 : i32
    %c0_i32_0 = arith.constant 0 : i32
    %c0_i32_1 = arith.constant 0 : i32
    return %c0_i32, %c0_i32_0 : i32, i32
  }
  func.func @transform_7(%arg0: i32) -> (i32, i32) {
    %c0_i32 = arith.constant 0 : i32
    %c0_i32_0 = arith.constant 0 : i32
    %c0_i32_1 = arith.constant 0 : i32
    return %c0_i32, %c0_i32_0 : i32, i32
  }
  func.func @transform_8(%arg0: i32) -> (i32, i32) {
    %c0_i32 = arith.constant 0 : i32
    %c0_i32_0 = arith.constant 0 : i32
    %c0_i32_1 = arith.constant 0 : i32
    return %c0_i32, %c0_i32_0 : i32, i32
  }
  func.func @transform_9(%arg0: i32) -> (i32, i32) {
    %c0_i32 = arith.constant 0 : i32
    %c0_i32_0 = arith.constant 0 : i32
    %c0_i32_1 = arith.constant 0 : i32
    return %c0_i32, %c0_i32_0 : i32, i32
  }
  func.func @transform_10(%arg0: i32) -> (i32, i32) {
    %c0_i32 = arith.constant 0 : i32
    %c0_i32_0 = arith.constant 0 : i32
    %c0_i32_1 = arith.constant 0 : i32
    return %c0_i32, %c0_i32_0 : i32, i32
  }
  func.func @transform_11(%arg0: i32) -> (i32, i32) {
    %c0_i32 = arith.constant 0 : i32
    %c0_i32_0 = arith.constant 0 : i32
    return %arg0, %c0_i32 : i32, i32
  }
}

</mosaic_0001>

<llo_original>
// kernel: tpu_custom_call.1
$region0: #{tpu_custom_call.1}
  #allocation0 [shape = 'u32[]', space=smem, size = 0x4, offset = 0x4, fixed_abs, tag = 'smem constant byte address 0x4 - core index']
  #allocation1 [shape = 'u32[144,128]{1,0:T(1,128)}', space=vmem, size = 0x12000, scoped, tag = 'internal scratch']
  %s0 = inlined_call_operand.vmem [shape: f32[16,128], index: 0, kind: input, shape index: {}]
  %s1 = inlined_call_operand.vmem [shape: f32[2,8,8], index: 1, kind: input, shape index: {}]
  %s2 = inlined_call_operand.hbm [shape: bf16[128,384], index: 2, kind: input, shape index: {}]
  %s3 = inlined_call_operand.vmem [shape: f32[8,384], index: 3, kind: input, shape index: {}]
  %s4 = inlined_call_operand.vmem [shape: bf16[128,32], index: 4, kind: input, shape index: {}]
  %s5 = inlined_call_operand.vmem [shape: bf16[32,32], index: 5, kind: input, shape index: {}]
  %s6 = inlined_call_operand.hbm [shape: f32[1,32], index: 6, kind: input, shape index: {}]
  %s7 = inlined_call_operand.vmem [shape: bf16[32,32], index: 7, kind: input, shape index: {}]
  %s8 = inlined_call_operand.hbm [shape: bf16[32,128], index: 8, kind: input, shape index: {}]
  %s9 = inlined_call_operand.hbm [shape: f32[1,128], index: 9, kind: input, shape index: {}]
  %s10 = inlined_call_operand.vmem [shape: f32[6,32], index: 10, kind: input, shape index: {}]
  %s11 = inlined_call_operand.hbm [shape: f32[16,128], index: 11, kind: output, shape index: {}]
  %s12 = sld [smem:[#allocation0]]
  $region93: #{tpu_custom_call.1} parent=0
    _
  %s14 = ssub.s32 1, %s12
  %s15 = scalar_select 0, %s14, %s12
  $region1: #{tpu_custom_call.1} parent=0
    #allocation2 [shape = 'u8[98304]{0}', space=vmem, size = 0x18000, scoped, tag = 'input window, operand 2, single buffered']
    #allocation3 [shape = 's32[2]{0}', space=sflag, size = 0x8, scoped, tag = 'scoped memory for tpu_custom_call.1']
    #allocation4 [shape = 's32[2]{0}', space=sflag, size = 0x8, scoped, tag = 'scoped memory for tpu_custom_call.1']
    #allocation5 [shape = 'u8[512]{0}', space=vmem, size = 0x400, scoped, tag = 'input window, operand 6, single buffered']
    #allocation6 [shape = 's32[1]{0}', space=sflag, size = 0x4, scoped, tag = 'scoped memory for tpu_custom_call.1']
    #allocation7 [shape = 'u8[8192]{0}', space=vmem, size = 0x2000, scoped, tag = 'input window, operand 8, single buffered']
    #allocation8 [shape = 'u8[512]{0}', space=vmem, size = 0x400, scoped, tag = 'input window, operand 9, single buffered']
    #allocation9 [shape = 's32[1]{0}', space=sflag, size = 0x4, scoped, tag = 'scoped memory for tpu_custom_call.1']
    #allocation10 [shape = 'u8[8192]{0}', space=vmem, size = 0x2000, scoped, tag = 'output window, operand 0']
    %16 = vsyncpa [#allocation3], 0
    %17 = vsyncpa [#allocation6], 0
    %18 = vsyncpa [#allocation9], 0
    %19 = vsyncpa [#allocation4], 0
    %s20 = scalar_lea.sflag [#allocation4], 1
    %21 = vsyncpa %s20, 0
    loop: start=0, step=1, limit=4
    $region2: #{tpu_custom_call.1} parent=1 // loop_pre_header
      _
    $region3: #{tpu_custom_call.1} parent=1 // loop_header
      %s23 = sphi 0, %s27
      %p24 = scmp.ge.s32.totalorder %s23, 4
      %s33 = sphi 0, %s35
      %s36 = sphi 0, %s33
      %s37 = sphi 0, %s36
      %s53 = sphi 0, %s37
      %s59 = sphi 0, %s61
      %s62 = sphi 0, %s59
      %s63 = sphi 0, %s62
      %s79 = sphi 0, %s63
      %s83 = sphi 0, %s83
      %s85 = sphi 0, %s83
      %s86 = sphi 0, %s85
      %s100 = sphi 0, %s86
      %s104 = sphi 0, %s104
      %s106 = sphi 0, %s104
      %s107 = sphi 0, %s106
      %s121 = sphi 0, %s107
      %s125 = sphi 0, %s125
      %s127 = sphi 0, %s125
      %s128 = sphi 0, %s127
      %s142 = sphi 0, %s128
      %s146 = sphi 0, %s146
      %s148 = sphi 0, %s146
      %s149 = sphi 0, %s148
      %s163 = sphi 0, %s149
      %s167 = sphi 0, %s167
      %s169 = sphi 0, %s167
      %s170 = sphi 0, %s169
      %s184 = sphi 0, %s170
      %s188 = sphi 0, %s188
      %s190 = sphi 0, %s188
      %s191 = sphi 0, %s190
      %s205 = sphi 0, %s191
      %s209 = sphi 0, %s209
      %s211 = sphi 0, %s209
      %s212 = sphi 0, %s211
      %s226 = sphi 0, %s212
      %s230 = sphi 0, %s230
      %s232 = sphi 0, %s230
      %s233 = sphi 0, %s232
      %s247 = sphi 0, %s233
      %s251 = sphi 0, %s251
      %s253 = sphi 0, %s251
      %s254 = sphi 0, %s253
      %s268 = sphi 0, %s254
      %s274 = sphi 0, %s276
      %s277 = sphi 0, %s274
      %s278 = sphi 0, %s277
      %s294 = sphi 0, %s278
    $region4: #{tpu_custom_call.1} parent=1 // loop_header_branch
      %26 = sbr.rel (%p24) target = $region8
    $region5: #{tpu_custom_call.1} parent=1 // loop_body
      %s28 = ssub.s32 %s23, 1
      %s29 = ssub.s32 %s23, 2
      %s30 = sadd.s32 %s23, 1
      %s31 = ssub.s32 %s23, %s30
      %p32 = scmp.eq.s32.totalorder %s31, 0
      %s34 = sadd.s32 %s33, 1
      %s35 = scalar_select %p32, %s33, %s34
      %p38 = pneg %p32
      %p39 = scmp.eq.s32.totalorder %s23, 1
      %p40 = por %p38, %p39
      %p41 = scmp.ne.s32.totalorder %s33, %s36
      %p42 = scmp.eq.s32.totalorder %s23, 0
      %p43 = por %p41, %p42
      %p44 = scmp.ne.s32.totalorder %s33, %s36
      %p45 = scmp.eq.s32.totalorder %s28, 1
      %p46 = por %p44, %p45
      %p47 = scmp.ne.s32.totalorder %s36, %s37
      %p48 = scmp.eq.s32.totalorder %s28, 0
      %p49 = por %p47, %p48
      %p50 = scmp.ne.s32.totalorder %s36, %s37
      %p51 = scmp.eq.s32.totalorder %s29, 1
      %p52 = por %p50, %p51
      %p54 = scmp.ne.s32.totalorder %s37, %s53
      %p55 = scmp.eq.s32.totalorder %s29, 0
      %p56 = por %p54, %p55
      %s57 = ssub.s32 %s23, %s30
      %p58 = scmp.eq.s32.totalorder %s57, 0
      %s60 = sadd.s32 %s59, 1
      %s61 = scalar_select %p58, %s59, %s60
      %p64 = pneg %p58
      %p65 = scmp.eq.s32.totalorder %s23, 1
      %p66 = por %p64, %p65
      %p67 = scmp.ne.s32.totalorder %s59, %s62
      %p68 = scmp.eq.s32.totalorder %s23, 0
      %p69 = por %p67, %p68
      %p70 = scmp.ne.s32.totalorder %s59, %s62
      %p71 = scmp.eq.s32.totalorder %s28, 1
      %p72 = por %p70, %p71
      %p73 = scmp.ne.s32.totalorder %s62, %s63
      %p74 = scmp.eq.s32.totalorder %s28, 0
      %p75 = por %p73, %p74
      %p76 = scmp.ne.s32.totalorder %s62, %s63
      %p77 = scmp.eq.s32.totalorder %s29, 1
      %p78 = por %p76, %p77
      %p80 = scmp.ne.s32.totalorder %s63, %s79
      %p81 = scmp.eq.s32.totalorder %s29, 0
      %p82 = por %p80, %p81
      %s84 = sadd.s32 %s83, 1
      %p87 = scmp.eq.s32.totalorder %s23, 1
      %p88 = scmp.ne.s32.totalorder %s83, %s85
      %p89 = scmp.eq.s32.totalorder %s23, 0
      %p90 = por %p88, %p89
      %p91 = scmp.ne.s32.totalorder %s83, %s85
      %p92 = scmp.eq.s32.totalorder %s28, 1
      %p93 = por %p91, %p92
      %p94 = scmp.ne.s32.totalorder %s85, %s86
      %p95 = scmp.eq.s32.totalorder %s28, 0
      %p96 = por %p94, %p95
      %p97 = scmp.ne.s32.totalorder %s85, %s86
      %p98 = scmp.eq.s32.totalorder %s29, 1
      %p99 = por %p97, %p98
      %p101 = scmp.ne.s32.totalorder %s86, %s100
      %p102 = scmp.eq.s32.totalorder %s29, 0
      %p103 = por %p101, %p102
      %s105 = sadd.s32 %s104, 1
      %p108 = scmp.eq.s32.totalorder %s23, 1
      %p109 = scmp.ne.s32.totalorder %s104, %s106
      %p110 = scmp.eq.s32.totalorder %s23, 0
      %p111 = por %p109, %p110
      %p112 = scmp.ne.s32.totalorder %s104, %s106
      %p113 = scmp.eq.s32.totalorder %s28, 1
      %p114 = por %p112, %p113
      %p115 = scmp.ne.s32.totalorder %s106, %s107
      %p116 = scmp.eq.s32.totalorder %s28, 0
      %p117 = por %p115, %p116
      %p118 = scmp.ne.s32.totalorder %s106, %s107
      %p119 = scmp.eq.s32.totalorder %s29, 1
      %p120 = por %p118, %p119
      %p122 = scmp.ne.s32.totalorder %s107, %s121
      %p123 = scmp.eq.s32.totalorder %s29, 0
      %p124 = por %p122, %p123
      %s126 = sadd.s32 %s125, 1
      %p129 = scmp.eq.s32.totalorder %s23, 1
      %p130 = scmp.ne.s32.totalorder %s125, %s127
      %p131 = scmp.eq.s32.totalorder %s23, 0
      %p132 = por %p130, %p131
      %p133 = scmp.ne.s32.totalorder %s125, %s127
      %p134 = scmp.eq.s32.totalorder %s28, 1
      %p135 = por %p133, %p134
      %p136 = scmp.ne.s32.totalorder %s127, %s128
      %p137 = scmp.eq.s32.totalorder %s28, 0
      %p138 = por %p136, %p137
      %p139 = scmp.ne.s32.totalorder %s127, %s128
      %p140 = scmp.eq.s32.totalorder %s29, 1
      %p141 = por %p139, %p140
      %p143 = scmp.ne.s32.totalorder %s128, %s142
      %p144 = scmp.eq.s32.totalorder %s29, 0
      %p145 = por %p143, %p144
      %s147 = sadd.s32 %s146, 1
      %p150 = scmp.eq.s32.totalorder %s23, 1
      %p151 = scmp.ne.s32.totalorder %s146, %s148
      %p152 = scmp.eq.s32.totalorder %s23, 0
      %p153 = por %p151, %p152
      %p154 = scmp.ne.s32.totalorder %s146, %s148
      %p155 = scmp.eq.s32.totalorder %s28, 1
      %p156 = por %p154, %p155
      %p157 = scmp.ne.s32.totalorder %s148, %s149
      %p158 = scmp.eq.s32.totalorder %s28, 0
      %p159 = por %p157, %p158
      %p160 = scmp.ne.s32.totalorder %s148, %s149
      %p161 = scmp.eq.s32.totalorder %s29, 1
      %p162 = por %p160, %p161
      %p164 = scmp.ne.s32.totalorder %s149, %s163
      %p165 = scmp.eq.s32.totalorder %s29, 0
      %p166 = por %p164, %p165
      %s168 = sadd.s32 %s167, 1
      %p171 = scmp.eq.s32.totalorder %s23, 1
      %p172 = scmp.ne.s32.totalorder %s167, %s169
      %p173 = scmp.eq.s32.totalorder %s23, 0
      %p174 = por %p172, %p173
      %p175 = scmp.ne.s32.totalorder %s167, %s169
      %p176 = scmp.eq.s32.totalorder %s28, 1
      %p177 = por %p175, %p176
      %p178 = scmp.ne.s32.totalorder %s169, %s170
      %p179 = scmp.eq.s32.totalorder %s28, 0
      %p180 = por %p178, %p179
      %p181 = scmp.ne.s32.totalorder %s169, %s170
      %p182 = scmp.eq.s32.totalorder %s29, 1
      %p183 = por %p181, %p182
      %p185 = scmp.ne.s32.totalorder %s170, %s184
      %p186 = scmp.eq.s32.totalorder %s29, 0
      %p187 = por %p185, %p186
      %s189 = sadd.s32 %s188, 1
      %p192 = scmp.eq.s32.totalorder %s23, 1
      %p193 = scmp.ne.s32.totalorder %s188, %s190
      %p194 = scmp.eq.s32.totalorder %s23, 0
      %p195 = por %p193, %p194
      %p196 = scmp.ne.s32.totalorder %s188, %s190
      %p197 = scmp.eq.s32.totalorder %s28, 1
      %p198 = por %p196, %p197
      %p199 = scmp.ne.s32.totalorder %s190, %s191
      %p200 = scmp.eq.s32.totalorder %s28, 0
      %p201 = por %p199, %p200
      %p202 = scmp.ne.s32.totalorder %s190, %s191
      %p203 = scmp.eq.s32.totalorder %s29, 1
      %p204 = por %p202, %p203
      %p206 = scmp.ne.s32.totalorder %s191, %s205
      %p207 = scmp.eq.s32.totalorder %s29, 0
      %p208 = por %p206, %p207
      %s210 = sadd.s32 %s209, 1
      %p213 = scmp.eq.s32.totalorder %s23, 1
      %p214 = scmp.ne.s32.totalorder %s209, %s211
      %p215 = scmp.eq.s32.totalorder %s23, 0
      %p216 = por %p214, %p215
      %p217 = scmp.ne.s32.totalorder %s209, %s211
      %p218 = scmp.eq.s32.totalorder %s28, 1
      %p219 = por %p217, %p218
      %p220 = scmp.ne.s32.totalorder %s211, %s212
      %p221 = scmp.eq.s32.totalorder %s28, 0
      %p222 = por %p220, %p221
      %p223 = scmp.ne.s32.totalorder %s211, %s212
      %p224 = scmp.eq.s32.totalorder %s29, 1
      %p225 = por %p223, %p224
      %p227 = scmp.ne.s32.totalorder %s212, %s226
      %p228 = scmp.eq.s32.totalorder %s29, 0
      %p229 = por %p227, %p228
      %s231 = sadd.s32 %s230, 1
      %p234 = scmp.eq.s32.totalorder %s23, 1
      %p235 = scmp.ne.s32.totalorder %s230, %s232
      %p236 = scmp.eq.s32.totalorder %s23, 0
      %p237 = por %p235, %p236
      %p238 = scmp.ne.s32.totalorder %s230, %s232
      %p239 = scmp.eq.s32.totalorder %s28, 1
      %p240 = por %p238, %p239
      %p241 = scmp.ne.s32.totalorder %s232, %s233
      %p242 = scmp.eq.s32.totalorder %s28, 0
      %p243 = por %p241, %p242
      %p244 = scmp.ne.s32.totalorder %s232, %s233
      %p245 = scmp.eq.s32.totalorder %s29, 1
      %p246 = por %p244, %p245
      %p248 = scmp.ne.s32.totalorder %s233, %s247
      %p249 = scmp.eq.s32.totalorder %s29, 0
      %p250 = por %p248, %p249
      %s252 = sadd.s32 %s251, 1
      %p255 = scmp.eq.s32.totalorder %s23, 1
      %p256 = scmp.ne.s32.totalorder %s251, %s253
      %p257 = scmp.eq.s32.totalorder %s23, 0
      %p258 = por %p256, %p257
      %p259 = scmp.ne.s32.totalorder %s251, %s253
      %p260 = scmp.eq.s32.totalorder %s28, 1
      %p261 = por %p259, %p260
      %p262 = scmp.ne.s32.totalorder %s253, %s254
      %p263 = scmp.eq.s32.totalorder %s28, 0
      %p264 = por %p262, %p263
      %p265 = scmp.ne.s32.totalorder %s253, %s254
      %p266 = scmp.eq.s32.totalorder %s29, 1
      %p267 = por %p265, %p266
      %p269 = scmp.ne.s32.totalorder %s254, %s268
      %p270 = scmp.eq.s32.totalorder %s29, 0
      %p271 = por %p269, %p270
      %s272 = ssub.s32 %s23, %s30
      %p273 = scmp.eq.s32.totalorder %s272, 0
      %s275 = sadd.s32 %s274, 1
      %s276 = scalar_select %p273, %s274, %s275
      %p279 = pneg %p273
      %p280 = scmp.eq.s32.totalorder %s23, 1
      %p281 = por %p279, %p280
      %p282 = scmp.ne.s32.totalorder %s274, %s277
      %p283 = scmp.eq.s32.totalorder %s23, 0
      %p284 = por %p282, %p283
      %p285 = scmp.ne.s32.totalorder %s274, %s277
      %p286 = scmp.eq.s32.totalorder %s28, 1
      %p287 = por %p285, %p286
      %p288 = scmp.ne.s32.totalorder %s277, %s278
      %p289 = scmp.eq.s32.totalorder %s28, 0
      %p290 = por %p288, %p289
      %p291 = scmp.ne.s32.totalorder %s277, %s278
      %p292 = scmp.eq.s32.totalorder %s29, 1
      %p293 = por %p291, %p292
      %p295 = scmp.ne.s32.totalorder %s278, %s294
      %p296 = scmp.eq.s32.totalorder %s29, 0
      %p297 = por %p295, %p296
      %p298 = scmp.le.s32.totalorder 1, %s23
      %p299 = scmp.lt.s32.totalorder %s23, 3
      %p300 = pnand %p298, %p299
      %p301 = pneg %p300
      // Predicated region
      $region9: #{tpu_custom_call.1} parent=5 // pred_check
        _
      $region10: #{tpu_custom_call.1} parent=5 // pred_check_branch
        %303 = sbr.rel (%p300) target = $region12
      $region11: #{tpu_custom_call.1} parent=5 // pred_region
        %s304 = ssub.s32 %s23, 1
        // Predicated region
        $region13: #{tpu_custom_call.1} parent=11 // pred_check
          %p305 = pneg %p96
        $region14: #{tpu_custom_call.1} parent=11 // pred_check_branch
          %307 = sbr.rel (%p305) target = $region16
        $region15: #{tpu_custom_call.1} parent=11 // pred_region
          %s309 = ssub.s32 3072, 3072
          %310 = vsyncadd [#allocation3], %s309
          %s311 = sshll.u32 [#allocation2], 4
          %s312 = int_to_ptr.vmem [resolvable:$true] %s311
          %317 = dma.hbm_to_vmem [thread:$0]  %s2, 3072, %s312, [#allocation3], 192, 192, 12
        $region16: #{tpu_custom_call.1} parent=11 // pred_fallthru
          _
        // Predicated region
        $region17: #{tpu_custom_call.1} parent=11 // pred_check
          %p318 = pneg %p117
        $region18: #{tpu_custom_call.1} parent=11 // pred_check_branch
          %320 = sbr.rel (%p318) target = $region20
        $region19: #{tpu_custom_call.1} parent=11 // pred_region
          _
        $region20: #{tpu_custom_call.1} parent=11 // pred_fallthru
          _
        // Predicated region
        $region21: #{tpu_custom_call.1} parent=11 // pred_check
          %p321 = pneg %p138
        $region22: #{tpu_custom_call.1} parent=11 // pred_check_branch
          %323 = sbr.rel (%p321) target = $region24
        $region23: #{tpu_custom_call.1} parent=11 // pred_region
          _
        $region24: #{tpu_custom_call.1} parent=11 // pred_fallthru
          _
        // Predicated region
        $region25: #{tpu_custom_call.1} parent=11 // pred_check
          %p324 = pneg %p159
        $region26: #{tpu_custom_call.1} parent=11 // pred_check_branch
          %326 = sbr.rel (%p324) target = $region28
        $region27: #{tpu_custom_call.1} parent=11 // pred_region
          _
        $region28: #{tpu_custom_call.1} parent=11 // pred_fallthru
          _
        // Predicated region
        $region29: #{tpu_custom_call.1} parent=11 // pred_check
          %p327 = pneg %p180
        $region30: #{tpu_custom_call.1} parent=11 // pred_check_branch
          %329 = sbr.rel (%p327) target = $region32
        $region31: #{tpu_custom_call.1} parent=11 // pred_region
          %s331 = ssub.s32 16, 16
          %332 = vsyncadd [#allocation6], %s331
          %s334 = sshll.u32 [#allocation5], 4
          %s335 = int_to_ptr.vmem [resolvable:$true] %s334
          %337 = dma.hbm_to_vmem [thread:$0]  %s6, 16, %s335, [#allocation6]
        $region32: #{tpu_custom_call.1} parent=11 // pred_fallthru
          _
        // Predicated region
        $region33: #{tpu_custom_call.1} parent=11 // pred_check
          %p338 = pneg %p201
        $region34: #{tpu_custom_call.1} parent=11 // pred_check_branch
          %340 = sbr.rel (%p338) target = $region36
        $region35: #{tpu_custom_call.1} parent=11 // pred_region
          _
        $region36: #{tpu_custom_call.1} parent=11 // pred_fallthru
          _
        // Predicated region
        $region37: #{tpu_custom_call.1} parent=11 // pred_check
          %p341 = pneg %p222
        $region38: #{tpu_custom_call.1} parent=11 // pred_check_branch
          %343 = sbr.rel (%p341) target = $region40
        $region39: #{tpu_custom_call.1} parent=11 // pred_region
          %s345 = ssub.s32 256, 256
          %346 = vsyncadd [#allocation6], %s345
          %s347 = sshll.u32 [#allocation7], 4
          %s348 = int_to_ptr.vmem [resolvable:$true] %s347
          %353 = dma.hbm_to_vmem [thread:$0]  %s8, 256, %s348, [#allocation6], 64, 64, 4
        $region40: #{tpu_custom_call.1} parent=11 // pred_fallthru
          _
        // Predicated region
        $region41: #{tpu_custom_call.1} parent=11 // pred_check
          %p354 = pneg %p243
        $region42: #{tpu_custom_call.1} parent=11 // pred_check_branch
          %356 = sbr.rel (%p354) target = $region44
        $region43: #{tpu_custom_call.1} parent=11 // pred_region
          %s358 = ssub.s32 16, 16
          %359 = vsyncadd [#allocation9], %s358
          %s361 = sshll.u32 [#allocation8], 4
          %s362 = int_to_ptr.vmem [resolvable:$true] %s361
          %364 = dma.hbm_to_vmem [thread:$0]  %s9, 16, %s362, [#allocation9]
        $region44: #{tpu_custom_call.1} parent=11 // pred_fallthru
          _
        // Predicated region
        $region45: #{tpu_custom_call.1} parent=11 // pred_check
          %p365 = pneg %p264
        $region46: #{tpu_custom_call.1} parent=11 // pred_check_branch
          %367 = sbr.rel (%p365) target = $region48
        $region47: #{tpu_custom_call.1} parent=11 // pred_region
          _
        $region48: #{tpu_custom_call.1} parent=11 // pred_fallthru
          _
      $region12: #{tpu_custom_call.1} parent=5 // pred_fallthru
        _
      %p368 = scmp.lt.s32.totalorder %s23, 2
      // Predicated region
      $region49: #{tpu_custom_call.1} parent=5 // pred_check
        %p369 = pneg %p368
      $region50: #{tpu_custom_call.1} parent=5 // pred_check_branch
        %371 = sbr.rel (%p369) target = $region52
      $region51: #{tpu_custom_call.1} parent=5 // pred_region
        // Predicated region
        $region53: #{tpu_custom_call.1} parent=51 // pred_check
          %p372 = pneg %p43
        $region54: #{tpu_custom_call.1} parent=51 // pred_check_branch
          %374 = sbr.rel (%p372) target = $region56
        $region55: #{tpu_custom_call.1} parent=51 // pred_region
          %p375 = scmp.lt.s32.totalorder %s23, 1
          %s376 = scalar_select %p375, %s23, 1
          %s377 = smul.addr %s376, 8
          %s378 = scalar_lea.vmem %s0, %s377
        $region56: #{tpu_custom_call.1} parent=51 // pred_fallthru
          _
        // Predicated region
        $region57: #{tpu_custom_call.1} parent=51 // pred_check
          %p379 = pneg %p69
        $region58: #{tpu_custom_call.1} parent=51 // pred_check_branch
          %381 = sbr.rel (%p379) target = $region60
        $region59: #{tpu_custom_call.1} parent=51 // pred_region
          %p382 = scmp.lt.s32.totalorder %s23, 1
          %s383 = scalar_select %p382, %s23, 1
          %s384 = smul.addr %s383, 8
          %s385 = scalar_lea.vmem %s1, %s384
        $region60: #{tpu_custom_call.1} parent=51 // pred_fallthru
          _
      $region52: #{tpu_custom_call.1} parent=5 // pred_fallthru
        _
      %p386 = scmp.le.s32.totalorder 1, %s23
      %p387 = scmp.lt.s32.totalorder %s23, 3
      %p388 = pnand %p386, %p387
      %p389 = pneg %p388
      // Predicated region
      $region61: #{tpu_custom_call.1} parent=5 // pred_check
        _
      $region62: #{tpu_custom_call.1} parent=5 // pred_check_branch
        %391 = sbr.rel (%p388) target = $region64
      $region63: #{tpu_custom_call.1} parent=5 // pred_region
        %s392 = ssub.s32 %s23, 1
        // Predicated region
        $region65: #{tpu_custom_call.1} parent=63 // pred_check
          %p393 = pneg %p96
        $region66: #{tpu_custom_call.1} parent=63 // pred_check_branch
          %395 = sbr.rel (%p393) target = $region68
        $region67: #{tpu_custom_call.1} parent=63 // pred_region
          %396 = dma.done [#allocation3], 3072
        $region68: #{tpu_custom_call.1} parent=63 // pred_fallthru
          _
        // Predicated region
        $region69: #{tpu_custom_call.1} parent=63 // pred_check
          %p397 = pneg %p180
        $region70: #{tpu_custom_call.1} parent=63 // pred_check_branch
          %399 = sbr.rel (%p397) target = $region72
        $region71: #{tpu_custom_call.1} parent=63 // pred_region
          %400 = dma.done [#allocation6], 16
        $region72: #{tpu_custom_call.1} parent=63 // pred_fallthru
          _
        // Predicated region
        $region73: #{tpu_custom_call.1} parent=63 // pred_check
          %p401 = pneg %p222
        $region74: #{tpu_custom_call.1} parent=63 // pred_check_branch
          %403 = sbr.rel (%p401) target = $region76
        $region75: #{tpu_custom_call.1} parent=63 // pred_region
          %404 = dma.done [#allocation6], 256
        $region76: #{tpu_custom_call.1} parent=63 // pred_fallthru
          _
        // Predicated region
        $region77: #{tpu_custom_call.1} parent=63 // pred_check
          %p405 = pneg %p243
        $region78: #{tpu_custom_call.1} parent=63 // pred_check_branch
          %407 = sbr.rel (%p405) target = $region80
        $region79: #{tpu_custom_call.1} parent=63 // pred_region
          %408 = dma.done [#allocation9], 16
        $region80: #{tpu_custom_call.1} parent=63 // pred_fallthru
          _
        %p409 = scmp.lt.s32.totalorder %s28, 1
        %s410 = scalar_select %p409, %s28, 1
        %s411 = smul.addr %s410, 8
        %s412 = scalar_lea.vmem %s0, %s411
        %p413 = pneg %p49
        %p414 = pneg %p46
        %p415 = scmp.lt.s32.totalorder %s28, 1
        %s416 = scalar_select %p415, %s28, 1
        %s417 = smul.addr %s416, 8
        %s418 = scalar_lea.vmem %s1, %s417
        %p419 = pneg %p75
        %p420 = pneg %p72
        %p421 = pneg %p96
        %p422 = pneg %p93
        %p423 = pneg %p117
        %p424 = pneg %p114
        %p425 = pneg %p138
        %p426 = pneg %p135
        %p427 = pneg %p159
        %p428 = pneg %p156
        %p429 = pneg %p180
        %p430 = pneg %p177
        %p431 = pneg %p201
        %p432 = pneg %p198
        %p433 = pneg %p222
        %p434 = pneg %p219
        %p435 = pneg %p243
        %p436 = pneg %p240
        %p437 = pneg %p264
        %p438 = pneg %p261
        %p439 = pneg %p290
        %p440 = pneg %p287
        %s441 = sand.u32 %s277, 1
        %s442 = scalar_lea.sflag [#allocation4], %s441
        %s443 = sand.u32 %s277, 1
        %s444 = smul.addr %s443, 8
        %s445 = scalar_lea.vmem [#allocation10], %s444
        %p446 = scmp.lt.s32.totalorder %s28, 1
        %s447 = scalar_select %p446, %s28, 1
        %s448 = smul.addr %s447, 8
        %s449 = scalar_lea.vmem %s0, %s448
        %p450 = scmp.lt.s32.totalorder %s28, 1
        %s451 = scalar_select %p450, %s28, 1
        %s452 = smul.addr %s451, 8
        %s453 = scalar_lea.vmem %s1, %s452
        %v455 = vld [vmem:[%s449] sm:$0xff]
        %v456 = vpack.c.bf16 %v455, %v455
        %v457 = vld [vmem:[#allocation2] sm:$0xff]
        %v458 = vld [vmem:[#allocation2 + $0x8] sm:$0xf]
        %v459 = vld [vmem:[#allocation2 + $0xc] sm:$0xff]
        %v460 = vld [vmem:[#allocation2 + $0x14] sm:$0xf]
        %v461 = vld [vmem:[#allocation2 + $0x18] sm:$0xff]
        %v462 = vld [vmem:[#allocation2 + $0x20] sm:$0xf]
        %v463 = vld [vmem:[#allocation2 + $0x24] sm:$0xff]
        %v464 = vld [vmem:[#allocation2 + $0x2c] sm:$0xf]
        %v465 = vld [vmem:[#allocation2 + $0x30] sm:$0xff]
        %v466 = vld [vmem:[#allocation2 + $0x38] sm:$0xf]
        %v467 = vld [vmem:[#allocation2 + $0x3c] sm:$0xff]
        %v468 = vld [vmem:[#allocation2 + $0x44] sm:$0xf]
        %v469 = vld [vmem:[#allocation2 + $0x48] sm:$0xff]
        %v470 = vld [vmem:[#allocation2 + $0x50] sm:$0xf]
        %v471 = vld [vmem:[#allocation2 + $0x54] sm:$0xff]
        %v472 = vld [vmem:[#allocation2 + $0x5c] sm:$0xf]
        %v473 = vld [vmem:[#allocation2 + $0x60] sm:$0xff]
        %v474 = vld [vmem:[#allocation2 + $0x68] sm:$0xf]
        %v475 = vld [vmem:[#allocation2 + $0x6c] sm:$0xff]
        %v476 = vld [vmem:[#allocation2 + $0x74] sm:$0xf]
        %v477 = vld [vmem:[#allocation2 + $0x78] sm:$0xff]
        %v478 = vld [vmem:[#allocation2 + $0x80] sm:$0xf]
        %v479 = vld [vmem:[#allocation2 + $0x84] sm:$0xff]
        %v480 = vld [vmem:[#allocation2 + $0x8c] sm:$0xf]
        %v481 = vld [vmem:[#allocation2 + $0x90] sm:$0xff]
        %v482 = vld [vmem:[#allocation2 + $0x98] sm:$0xf]
        %v483 = vld [vmem:[#allocation2 + $0x9c] sm:$0xff]
        %v484 = vld [vmem:[#allocation2 + $0xa4] sm:$0xf]
        %v485 = vld [vmem:[#allocation2 + $0xa8] sm:$0xff]
        %v486 = vld [vmem:[#allocation2 + $0xb0] sm:$0xf]
        %v487 = vld [vmem:[#allocation2 + $0xb4] sm:$0xff]
        %v488 = vld [vmem:[#allocation2 + $0xbc] sm:$0xf]
        %v521 = vunpack.c.l.b16 %v457
        %v522 = vunpack.c.h.b16 %v457
        %v523 = vunpack.c.l.b16 %v458
        %v524 = vunpack.c.l.b16 %v459
        %v525 = vunpack.c.h.b16 %v459
        %v526 = vunpack.c.l.b16 %v460
        %v527 = vunpack.c.l.b16 %v461
        %v528 = vunpack.c.h.b16 %v461
        %v529 = vunpack.c.l.b16 %v462
        %v530 = vunpack.c.l.b16 %v463
        %v531 = vunpack.c.h.b16 %v463
        %v532 = vunpack.c.l.b16 %v464
        %v533 = vunpack.c.l.b16 %v465
        %v534 = vunpack.c.h.b16 %v465
        %v535 = vunpack.c.l.b16 %v466
        %v536 = vunpack.c.l.b16 %v467
        %v537 = vunpack.c.h.b16 %v467
        %v538 = vunpack.c.l.b16 %v468
        %v539 = vunpack.c.l.b16 %v469
        %v540 = vunpack.c.h.b16 %v469
        %v541 = vunpack.c.l.b16 %v470
        %v542 = vunpack.c.l.b16 %v471
        %v543 = vunpack.c.h.b16 %v471
        %v544 = vunpack.c.l.b16 %v472
        %v545 = vunpack.c.l.b16 %v473
        %v546 = vunpack.c.h.b16 %v473
        %v547 = vunpack.c.l.b16 %v474
        %v548 = vunpack.c.l.b16 %v475
        %v549 = vunpack.c.h.b16 %v475
        %v550 = vunpack.c.l.b16 %v476
        %v551 = vunpack.c.l.b16 %v477
        %v552 = vunpack.c.h.b16 %v477
        %v553 = vunpack.c.l.b16 %v478
        %v554 = vunpack.c.l.b16 %v479
        %v555 = vunpack.c.h.b16 %v479
        %v556 = vunpack.c.l.b16 %v480
        %v557 = vunpack.c.l.b16 %v481
        %v558 = vunpack.c.h.b16 %v481
        %v559 = vunpack.c.l.b16 %v482
        %v560 = vunpack.c.l.b16 %v483
        %v561 = vunpack.c.h.b16 %v483
        %v562 = vunpack.c.l.b16 %v484
        %v563 = vunpack.c.l.b16 %v485
        %v564 = vunpack.c.h.b16 %v485
        %v565 = vunpack.c.l.b16 %v486
        %v566 = vunpack.c.l.b16 %v487
        %v567 = vunpack.c.h.b16 %v487
        %v568 = vunpack.c.l.b16 %v488
        %v569 = vpack.c.b16 %v524, %v521
        %v570 = vpack.c.b16 %v525, %v522
        %v571 = vpack.c.b16 %v526, %v523
        %v572 = vpack.c.b16 %v530, %v527
        %v573 = vpack.c.b16 %v531, %v528
        %v574 = vpack.c.b16 %v532, %v529
        %v575 = vpack.c.b16 %v536, %v533
        %v576 = vpack.c.b16 %v537, %v534
        %v577 = vpack.c.b16 %v538, %v535
        %v578 = vpack.c.b16 %v542, %v539
        %v579 = vpack.c.b16 %v543, %v540
        %v580 = vpack.c.b16 %v544, %v541
        %v581 = vpack.c.b16 %v548, %v545
        %v582 = vpack.c.b16 %v549, %v546
        %v583 = vpack.c.b16 %v550, %v547
        %v584 = vpack.c.b16 %v554, %v551
        %v585 = vpack.c.b16 %v555, %v552
        %v586 = vpack.c.b16 %v556, %v553
        %v587 = vpack.c.b16 %v560, %v557
        %v588 = vpack.c.b16 %v561, %v558
        %v589 = vpack.c.b16 %v562, %v559
        %v590 = vpack.c.b16 %v566, %v563
        %v591 = vpack.c.b16 %v567, %v564
        %v592 = vpack.c.b16 %v568, %v565
        %617 = vmatprep.subr.bf16.mxu0 %v591
        %618 = vmatpush1.bf16.msra.mxu0 %v590
        %619 = vmatprep.subr.bf16.mxu0 %v588
        %620 = vmatpush1.bf16.msra.mxu0 %v587
        %621 = vmatprep.subr.bf16.mxu0 %v585
        %622 = vmatpush1.bf16.msra.mxu0 %v584
        %623 = vmatprep.subr.bf16.mxu0 %v582
        %624 = vmatpush1.bf16.msra.mxu0 %v581
        %625 = vmatprep.subr.bf16.mxu0 %v579
        %626 = vmatpush1.bf16.msra.mxu0 %v578
        %627 = vmatprep.subr.bf16.mxu0 %v576
        %628 = vmatpush1.bf16.msra.mxu0 %v575
        %629 = vmatprep.subr.bf16.mxu0 %v573
        %630 = vmatpush1.bf16.msra.mxu0 %v572
        %631 = vmatprep.subr.bf16.mxu0 %v570
        %632 = vmatpush1.bf16.msra.mxu0 %v569
        %633 = vmatprep.subr.bf16.mxu0 0
        %634 = vmatpush2.bf16.msra.mxu0 0
        %635 = vmatprep.subr.bf16.mxu0 0
        %636 = vmatpush2.bf16.msra.mxu0 0
        %637 = vmatprep.subr.bf16.mxu0 0
        %638 = vmatpush2.bf16.msra.mxu0 0
        %639 = vmatprep.subr.bf16.mxu0 0
        %640 = vmatpush2.bf16.msra.mxu0 0
        %641 = vmatprep.subr.bf16.mxu0 0
        %642 = vmatpush2.bf16.msra.mxu0 0
        %643 = vmatprep.subr.bf16.mxu0 0
        %644 = vmatpush2.bf16.msra.mxu0 0
        %645 = vmatprep.subr.bf16.mxu0 0
        %646 = vmatpush2.bf16.msra.mxu0 0
        %647 = vmatprep.subr.bf16.mxu0 0
        %648 = vmatpush2.bf16.msra.mxu0 0
        %649 = vmatprep.mubr.bf16.mxu0 0
        %650 = vmatmul.mubr.bf16.gmra.mxu0 %v456
        %v651 = vpop.f32.mrf.mxu0
        %v652 = vadd.f32 0.0, %v651
        %v653 = vpop.f32.mrf.mxu0
        %v654 = vadd.f32 0.0, %v653
        %v655 = vpop.f32.mrf.mxu0
        %v656 = vpop.f32.mrf.mxu0
        %657 = vdwg.mxu0
        %658 = vmatprep.subr.bf16.mxu0 0
        %659 = vmatpush1.bf16.msra.mxu0 %v592
        %660 = vmatprep.subr.bf16.mxu0 0
        %661 = vmatpush1.bf16.msra.mxu0 %v589
        %662 = vmatprep.subr.bf16.mxu0 0
        %663 = vmatpush1.bf16.msra.mxu0 %v586
        %664 = vmatprep.subr.bf16.mxu0 0
        %665 = vmatpush1.bf16.msra.mxu0 %v583
        %666 = vmatprep.subr.bf16.mxu0 0
        %667 = vmatpush1.bf16.msra.mxu0 %v580
        %668 = vmatprep.subr.bf16.mxu0 0
        %669 = vmatpush1.bf16.msra.mxu0 %v577
        %670 = vmatprep.subr.bf16.mxu0 0
        %671 = vmatpush1.bf16.msra.mxu0 %v574
        %672 = vmatprep.subr.bf16.mxu0 0
        %673 = vmatpush1.bf16.msra.mxu0 %v571
        %674 = vmatprep.subr.bf16.mxu0 0
        %675 = vmatpush2.bf16.msra.mxu0 0
        %676 = vmatprep.subr.bf16.mxu0 0
        %677 = vmatpush2.bf16.msra.mxu0 0
        %678 = vmatprep.subr.bf16.mxu0 0
        %679 = vmatpush2.bf16.msra.mxu0 0
        %680 = vmatprep.subr.bf16.mxu0 0
        %681 = vmatpush2.bf16.msra.mxu0 0
        %682 = vmatprep.subr.bf16.mxu0 0
        %683 = vmatpush2.bf16.msra.mxu0 0
        %684 = vmatprep.subr.bf16.mxu0 0
        %685 = vmatpush2.bf16.msra.mxu0 0
        %686 = vmatprep.subr.bf16.mxu0 0
        %687 = vmatpush2.bf16.msra.mxu0 0
        %688 = vmatprep.subr.bf16.mxu0 0
        %689 = vmatpush2.bf16.msra.mxu0 0
        %690 = vmatprep.mubr.bf16.mxu0 0
        %691 = vmatmul.mubr.bf16.gmra.mxu0 %v456
        %v692 = vpop.f32.mrf.mxu0
        %v693 = vadd.f32 0.0, %v692
        %v694 = vpop.f32.mrf.mxu0
        %v695 = vpop.f32.mrf.mxu0
        %v696 = vpop.f32.mrf.mxu0
        %697 = vdwg.mxu0
        %v698 = vld [vmem:[%s3] sm:$0xff]
        %v699 = vld [vmem:[%s3 + $0x8] sm:$0xff]
        %v700 = vld [vmem:[%s3 + $0x10] sm:$0xff]
        %v701 = vadd.f32 %v652, %v698
        %v702 = vadd.f32 %v654, %v699
        %v703 = vadd.f32 %v693, %v700
        %705 = vrot.lane.b32.xlu0 %v701, 96
        %v706 = vpop.permute.xlu0 %705
        %708 = vrot.lane.b32.xlu0 %v701, 64
        %v709 = vpop.permute.xlu0 %708
        %711 = vrot.lane.b32.xlu0 %v701, 32
        %v712 = vpop.permute.xlu0 %711
        %v714 = vpack.c.bf16 %v701, %v701
        %v715 = vpack.c.bf16 %v706, %v706
        %v716 = vpack.c.bf16 %v709, %v709
        %v717 = vpack.c.bf16 %v712, %v712
        %719 = vrot.lane.b32.xlu0 %v702, 96
        %v720 = vpop.permute.xlu0 %719
        %722 = vrot.lane.b32.xlu0 %v702, 64
        %v723 = vpop.permute.xlu0 %722
        %725 = vrot.lane.b32.xlu0 %v702, 32
        %v726 = vpop.permute.xlu0 %725
        %v728 = vpack.c.bf16 %v702, %v702
        %v729 = vpack.c.bf16 %v720, %v720
        %v730 = vpack.c.bf16 %v723, %v723
        %v731 = vpack.c.bf16 %v726, %v726
        %733 = vrot.lane.b32.xlu0 %v703, 96
        %v734 = vpop.permute.xlu0 %733
        %736 = vrot.lane.b32.xlu0 %v703, 64
        %v737 = vpop.permute.xlu0 %736
        %739 = vrot.lane.b32.xlu0 %v703, 32
        %v740 = vpop.permute.xlu0 %739
        %v742 = vpack.c.bf16 %v703, %v703
        %v743 = vpack.c.bf16 %v734, %v734
        %v744 = vpack.c.bf16 %v737, %v737
        %v745 = vpack.c.bf16 %v740, %v740
        %vm746 = vcmask 261120
        %v748 = vsel %vm746, %v714, 0
        %v751 = vsel %vm746, %v728, 0
        %753 = vmatprep.subr.bf16.mxu0 0
        %754 = vmatpush1.bf16.xpose.msra.mxu0 0
        %755 = vmatprep.subr.bf16.mxu0 0
        %756 = vmatpush1.bf16.xpose.msra.mxu0 0
        %757 = vmatprep.subr.bf16.mxu0 0
        %758 = vmatpush1.bf16.xpose.msra.mxu0 0
        %759 = vmatprep.subr.bf16.mxu0 0
        %760 = vmatpush1.bf16.xpose.msra.mxu0 0
        %761 = vmatprep.subr.bf16.mxu0 0
        %762 = vmatpush1.bf16.xpose.msra.mxu0 0
        %763 = vmatprep.subr.bf16.mxu0 0
        %764 = vmatpush1.bf16.xpose.msra.mxu0 0
        %765 = vmatprep.subr.bf16.mxu0 0
        %766 = vmatpush1.bf16.xpose.msra.mxu0 0
        %767 = vmatprep.subr.bf16.mxu0 0
        %768 = vmatpush1.bf16.xpose.msra.mxu0 %v751
        %769 = vmatprep.subr.bf16.mxu0 0
        %770 = vmatpush2.bf16.xpose.msra.mxu0 0
        %771 = vmatprep.subr.bf16.mxu0 0
        %772 = vmatpush2.bf16.xpose.msra.mxu0 0
        %773 = vmatprep.subr.bf16.mxu0 0
        %774 = vmatpush2.bf16.xpose.msra.mxu0 0
        %775 = vmatprep.subr.bf16.mxu0 0
        %776 = vmatpush2.bf16.xpose.msra.mxu0 0
        %777 = vmatprep.subr.bf16.mxu0 0
        %778 = vmatpush2.bf16.xpose.msra.mxu0 0
        %779 = vmatprep.subr.bf16.mxu0 0
        %780 = vmatpush2.bf16.xpose.msra.mxu0 0
        %781 = vmatprep.subr.bf16.mxu0 0
        %782 = vmatpush2.bf16.xpose.msra.mxu0 0
        %783 = vmatprep.subr.bf16.mxu0 0
        %784 = vmatpush2.bf16.xpose.msra.mxu0 0
        %785 = vmatprep.mubr.bf16.mxu0 0
        %786 = vmatmul.mubr.bf16.gmra.mxu0 %v748
        %v787 = vpop.f32.mrf.mxu0
        %v788 = vadd.f32 0.0, %v787
        %v789 = vpop.f32.mrf.mxu0
        %v790 = vpop.f32.mrf.mxu0
        %v791 = vpop.f32.mrf.mxu0
        %792 = vdwg.mxu0
        %v794 = vsel %vm746, %v715, 0
        %v797 = vsel %vm746, %v729, 0
        %799 = vmatprep.subr.bf16.mxu0 0
        %800 = vmatpush1.bf16.xpose.msra.mxu0 0
        %801 = vmatprep.subr.bf16.mxu0 0
        %802 = vmatpush1.bf16.xpose.msra.mxu0 0
        %803 = vmatprep.subr.bf16.mxu0 0
        %804 = vmatpush1.bf16.xpose.msra.mxu0 0
        %805 = vmatprep.subr.bf16.mxu0 0
        %806 = vmatpush1.bf16.xpose.msra.mxu0 0
        %807 = vmatprep.subr.bf16.mxu0 0
        %808 = vmatpush1.bf16.xpose.msra.mxu0 0
        %809 = vmatprep.subr.bf16.mxu0 0
        %810 = vmatpush1.bf16.xpose.msra.mxu0 0
        %811 = vmatprep.subr.bf16.mxu0 0
        %812 = vmatpush1.bf16.xpose.msra.mxu0 0
        %813 = vmatprep.subr.bf16.mxu0 0
        %814 = vmatpush1.bf16.xpose.msra.mxu0 %v797
        %815 = vmatprep.subr.bf16.mxu0 0
        %816 = vmatpush2.bf16.xpose.msra.mxu0 0
        %817 = vmatprep.subr.bf16.mxu0 0
        %818 = vmatpush2.bf16.xpose.msra.mxu0 0
        %819 = vmatprep.subr.bf16.mxu0 0
        %820 = vmatpush2.bf16.xpose.msra.mxu0 0
        %821 = vmatprep.subr.bf16.mxu0 0
        %822 = vmatpush2.bf16.xpose.msra.mxu0 0
        %823 = vmatprep.subr.bf16.mxu0 0
        %824 = vmatpush2.bf16.xpose.msra.mxu0 0
        %825 = vmatprep.subr.bf16.mxu0 0
        %826 = vmatpush2.bf16.xpose.msra.mxu0 0
        %827 = vmatprep.subr.bf16.mxu0 0
        %828 = vmatpush2.bf16.xpose.msra.mxu0 0
        %829 = vmatprep.subr.bf16.mxu0 0
        %830 = vmatpush2.bf16.xpose.msra.mxu0 0
        %831 = vmatprep.mubr.bf16.mxu0 0
        %832 = vmatmul.mubr.bf16.gmra.mxu0 %v794
        %v833 = vpop.f32.mrf.mxu0
        %v834 = vadd.f32 0.0, %v833
        %v835 = vpop.f32.mrf.mxu0
        %v836 = vpop.f32.mrf.mxu0
        %v837 = vpop.f32.mrf.mxu0
        %838 = vdwg.mxu0
        %v840 = vsel %vm746, %v716, 0
        %v843 = vsel %vm746, %v730, 0
        %845 = vmatprep.subr.bf16.mxu0 0
        %846 = vmatpush1.bf16.xpose.msra.mxu0 0
        %847 = vmatprep.subr.bf16.mxu0 0
        %848 = vmatpush1.bf16.xpose.msra.mxu0 0
        %849 = vmatprep.subr.bf16.mxu0 0
        %850 = vmatpush1.bf16.xpose.msra.mxu0 0
        %851 = vmatprep.subr.bf16.mxu0 0
        %852 = vmatpush1.bf16.xpose.msra.mxu0 0
        %853 = vmatprep.subr.bf16.mxu0 0
        %854 = vmatpush1.bf16.xpose.msra.mxu0 0
        %855 = vmatprep.subr.bf16.mxu0 0
        %856 = vmatpush1.bf16.xpose.msra.mxu0 0
        %857 = vmatprep.subr.bf16.mxu0 0
        %858 = vmatpush1.bf16.xpose.msra.mxu0 0
        %859 = vmatprep.subr.bf16.mxu0 0
        %860 = vmatpush1.bf16.xpose.msra.mxu0 %v843
        %861 = vmatprep.subr.bf16.mxu0 0
        %862 = vmatpush2.bf16.xpose.msra.mxu0 0
        %863 = vmatprep.subr.bf16.mxu0 0
        %864 = vmatpush2.bf16.xpose.msra.mxu0 0
        %865 = vmatprep.subr.bf16.mxu0 0
        %866 = vmatpush2.bf16.xpose.msra.mxu0 0
        %867 = vmatprep.subr.bf16.mxu0 0
        %868 = vmatpush2.bf16.xpose.msra.mxu0 0
        %869 = vmatprep.subr.bf16.mxu0 0
        %870 = vmatpush2.bf16.xpose.msra.mxu0 0
        %871 = vmatprep.subr.bf16.mxu0 0
        %872 = vmatpush2.bf16.xpose.msra.mxu0 0
        %873 = vmatprep.subr.bf16.mxu0 0
        %874 = vmatpush2.bf16.xpose.msra.mxu0 0
        %875 = vmatprep.subr.bf16.mxu0 0
        %876 = vmatpush2.bf16.xpose.msra.mxu0 0
        %877 = vmatprep.mubr.bf16.mxu0 0
        %878 = vmatmul.mubr.bf16.gmra.mxu0 %v840
        %v879 = vpop.f32.mrf.mxu0
        %v880 = vadd.f32 0.0, %v879
        %v881 = vpop.f32.mrf.mxu0
        %v882 = vpop.f32.mrf.mxu0
        %v883 = vpop.f32.mrf.mxu0
        %884 = vdwg.mxu0
        %v886 = vsel %vm746, %v717, 0
        %v889 = vsel %vm746, %v731, 0
        %891 = vmatprep.subr.bf16.mxu0 0
        %892 = vmatpush1.bf16.xpose.msra.mxu0 0
        %893 = vmatprep.subr.bf16.mxu0 0
        %894 = vmatpush1.bf16.xpose.msra.mxu0 0
        %895 = vmatprep.subr.bf16.mxu0 0
        %896 = vmatpush1.bf16.xpose.msra.mxu0 0
        %897 = vmatprep.subr.bf16.mxu0 0
        %898 = vmatpush1.bf16.xpose.msra.mxu0 0
        %899 = vmatprep.subr.bf16.mxu0 0
        %900 = vmatpush1.bf16.xpose.msra.mxu0 0
        %901 = vmatprep.subr.bf16.mxu0 0
        %902 = vmatpush1.bf16.xpose.msra.mxu0 0
        %903 = vmatprep.subr.bf16.mxu0 0
        %904 = vmatpush1.bf16.xpose.msra.mxu0 0
        %905 = vmatprep.subr.bf16.mxu0 0
        %906 = vmatpush1.bf16.xpose.msra.mxu0 %v889
        %907 = vmatprep.subr.bf16.mxu0 0
        %908 = vmatpush2.bf16.xpose.msra.mxu0 0
        %909 = vmatprep.subr.bf16.mxu0 0
        %910 = vmatpush2.bf16.xpose.msra.mxu0 0
        %911 = vmatprep.subr.bf16.mxu0 0
        %912 = vmatpush2.bf16.xpose.msra.mxu0 0
        %913 = vmatprep.subr.bf16.mxu0 0
        %914 = vmatpush2.bf16.xpose.msra.mxu0 0
        %915 = vmatprep.subr.bf16.mxu0 0
        %916 = vmatpush2.bf16.xpose.msra.mxu0 0
        %917 = vmatprep.subr.bf16.mxu0 0
        %918 = vmatpush2.bf16.xpose.msra.mxu0 0
        %919 = vmatprep.subr.bf16.mxu0 0
        %920 = vmatpush2.bf16.xpose.msra.mxu0 0
        %921 = vmatprep.subr.bf16.mxu0 0
        %922 = vmatpush2.bf16.xpose.msra.mxu0 0
        %923 = vmatprep.mubr.bf16.mxu0 0
        %924 = vmatmul.mubr.bf16.gmra.mxu0 %v886
        %v925 = vpop.f32.mrf.mxu0
        %v926 = vadd.f32 0.0, %v925
        %v927 = vpop.f32.mrf.mxu0
        %v928 = vpop.f32.mrf.mxu0
        %v929 = vpop.f32.mrf.mxu0
        %930 = vdwg.mxu0
        %v931 = vmul.f32 %v788, 0.35355338
        %v932 = vmul.f32 %v834, 0.35355338
        %v933 = vmul.f32 %v880, 0.35355338
        %v934 = vmul.f32 %v926, 0.35355338
        %v935 = vld [vmem:[%s453] sm:$0xff]
        %v936 = vadd.f32 %v931, %v935
        %v937 = vadd.f32 %v932, %v935
        %v938 = vadd.f32 %v933, %v935
        %v939 = vadd.f32 %v934, %v935
        %vm940 = vcmask 64512
        %v941 = vsel %vm940, %v936, -inf
        %942 = vmax.xlane.f32.xlu0 %v941
        %v943 = vpop.xlane.xlu0 %942
        %v944 = vsel %vm940, %v937, -inf
        %945 = vmax.xlane.f32.xlu0 %v944
        %v946 = vpop.xlane.xlu0 %945
        %v947 = vsel %vm940, %v938, -inf
        %948 = vmax.xlane.f32.xlu0 %v947
        %v949 = vpop.xlane.xlu0 %948
        %v950 = vsel %vm940, %v939, -inf
        %951 = vmax.xlane.f32.xlu0 %v950
        %v952 = vpop.xlane.xlu0 %951
        %v953 = vsub.f32 %v936, %v943
        %v954 = vsub.f32 %v937, %v946
        %v955 = vsub.f32 %v938, %v949
        %v956 = vsub.f32 %v939, %v952
        %v957 = vmul.f32 %v953, 1.442695
        %v958 = vpow.pop %v957
        %v959 = vmul.f32 %v954, 1.442695
        %v960 = vpow.pop %v959
        %v961 = vmul.f32 %v955, 1.442695
        %v962 = vpow.pop %v961
        %v963 = vmul.f32 %v956, 1.442695
        %v964 = vpow.pop %v963
        %v965 = vsel %vm940, %v958, 0.0
        %966 = vadd.xlane.f32.xlu0 %v965
        %v967 = vpop.xlane.xlu0 %966
        %v968 = vsel %vm940, %v960, 0.0
        %969 = vadd.xlane.f32.xlu0 %v968
        %v970 = vpop.xlane.xlu0 %969
        %v971 = vsel %vm940, %v962, 0.0
        %972 = vadd.xlane.f32.xlu0 %v971
        %v973 = vpop.xlane.xlu0 %972
        %v974 = vsel %vm940, %v964, 0.0
        %975 = vadd.xlane.f32.xlu0 %v974
        %v976 = vpop.xlane.xlu0 %975
        %v977 = vrcp.pop %v967
        %v978 = vrcp.pop %v970
        %v979 = vrcp.pop %v973
        %v980 = vrcp.pop %v976
        %v981 = vmul.f32 %v958, %v977
        %v982 = vmul.f32 %v960, %v978
        %v983 = vmul.f32 %v962, %v979
        %v984 = vmul.f32 %v964, %v980
        %v985 = vpack.c.bf16 %v981, %v981
        %v986 = vpack.c.bf16 %v982, %v982
        %v987 = vpack.c.bf16 %v983, %v983
        %v988 = vpack.c.bf16 %v984, %v984
        %v990 = vsel %vm940, %v985, 0
        %vm992 = vcmask 1043456
        %v994 = vsel %vm992, %v742, 0
        %996 = vmatprep.subr.bf16.mxu0 0
        %997 = vmatpush1.bf16.msra.mxu0 0
        %998 = vmatprep.subr.bf16.mxu0 0
        %999 = vmatpush1.bf16.msra.mxu0 0
        %1000 = vmatprep.subr.bf16.mxu0 0
        %1001 = vmatpush1.bf16.msra.mxu0 0
        %1002 = vmatprep.subr.bf16.mxu0 0
        %1003 = vmatpush1.bf16.msra.mxu0 0
        %1004 = vmatprep.subr.bf16.mxu0 0
        %1005 = vmatpush1.bf16.msra.mxu0 0
        %1006 = vmatprep.subr.bf16.mxu0 0
        %1007 = vmatpush1.bf16.msra.mxu0 0
        %1008 = vmatprep.subr.bf16.mxu0 0
        %1009 = vmatpush1.bf16.msra.mxu0 0
        %1010 = vmatprep.subr.bf16.mxu0 0
        %1011 = vmatpush1.bf16.msra.mxu0 %v994
        %1012 = vmatprep.subr.bf16.mxu0 0
        %1013 = vmatpush2.bf16.msra.mxu0 0
        %1014 = vmatprep.subr.bf16.mxu0 0
        %1015 = vmatpush2.bf16.msra.mxu0 0
        %1016 = vmatprep.subr.bf16.mxu0 0
        %1017 = vmatpush2.bf16.msra.mxu0 0
        %1018 = vmatprep.subr.bf16.mxu0 0
        %1019 = vmatpush2.bf16.msra.mxu0 0
        %1020 = vmatprep.subr.bf16.mxu0 0
        %1021 = vmatpush2.bf16.msra.mxu0 0
        %1022 = vmatprep.subr.bf16.mxu0 0
        %1023 = vmatpush2.bf16.msra.mxu0 0
        %1024 = vmatprep.subr.bf16.mxu0 0
        %1025 = vmatpush2.bf16.msra.mxu0 0
        %1026 = vmatprep.subr.bf16.mxu0 0
        %1027 = vmatpush2.bf16.msra.mxu0 0
        %1028 = vmatprep.mubr.bf16.mxu0 0
        %1029 = vmatmul.mubr.bf16.gmra.mxu0 %v990
        %v1030 = vpop.f32.mrf.mxu0
        %v1031 = vadd.f32 0.0, %v1030
        %v1032 = vpop.f32.mrf.mxu0
        %v1033 = vpop.f32.mrf.mxu0
        %v1034 = vpop.f32.mrf.mxu0
        %1035 = vdwg.mxu0
        %v1037 = vsel %vm940, %v986, 0
        %v1040 = vsel %vm992, %v743, 0
        %1042 = vmatprep.subr.bf16.mxu0 0
        %1043 = vmatpush1.bf16.msra.mxu0 0
        %1044 = vmatprep.subr.bf16.mxu0 0
        %1045 = vmatpush1.bf16.msra.mxu0 0
        %1046 = vmatprep.subr.bf16.mxu0 0
        %1047 = vmatpush1.bf16.msra.mxu0 0
        %1048 = vmatprep.subr.bf16.mxu0 0
        %1049 = vmatpush1.bf16.msra.mxu0 0
        %1050 = vmatprep.subr.bf16.mxu0 0
        %1051 = vmatpush1.bf16.msra.mxu0 0
        %1052 = vmatprep.subr.bf16.mxu0 0
        %1053 = vmatpush1.bf16.msra.mxu0 0
        %1054 = vmatprep.subr.bf16.mxu0 0
        %1055 = vmatpush1.bf16.msra.mxu0 0
        %1056 = vmatprep.subr.bf16.mxu0 0
        %1057 = vmatpush1.bf16.msra.mxu0 %v1040
        %1058 = vmatprep.subr.bf16.mxu0 0
        %1059 = vmatpush2.bf16.msra.mxu0 0
        %1060 = vmatprep.subr.bf16.mxu0 0
        %1061 = vmatpush2.bf16.msra.mxu0 0
        %1062 = vmatprep.subr.bf16.mxu0 0
        %1063 = vmatpush2.bf16.msra.mxu0 0
        %1064 = vmatprep.subr.bf16.mxu0 0
        %1065 = vmatpush2.bf16.msra.mxu0 0
        %1066 = vmatprep.subr.bf16.mxu0 0
        %1067 = vmatpush2.bf16.msra.mxu0 0
        %1068 = vmatprep.subr.bf16.mxu0 0
        %1069 = vmatpush2.bf16.msra.mxu0 0
        %1070 = vmatprep.subr.bf16.mxu0 0
        %1071 = vmatpush2.bf16.msra.mxu0 0
        %1072 = vmatprep.subr.bf16.mxu0 0
        %1073 = vmatpush2.bf16.msra.mxu0 0
        %1074 = vmatprep.mubr.bf16.mxu0 0
        %1075 = vmatmul.mubr.bf16.gmra.mxu0 %v1037
        %v1076 = vpop.f32.mrf.mxu0
        %v1077 = vadd.f32 0.0, %v1076
        %v1078 = vpop.f32.mrf.mxu0
        %v1079 = vpop.f32.mrf.mxu0
        %v1080 = vpop.f32.mrf.mxu0
        %1081 = vdwg.mxu0
        %v1083 = vsel %vm940, %v987, 0
        %v1086 = vsel %vm992, %v744, 0
        %1088 = vmatprep.subr.bf16.mxu0 0
        %1089 = vmatpush1.bf16.msra.mxu0 0
        %1090 = vmatprep.subr.bf16.mxu0 0
        %1091 = vmatpush1.bf16.msra.mxu0 0
        %1092 = vmatprep.subr.bf16.mxu0 0
        %1093 = vmatpush1.bf16.msra.mxu0 0
        %1094 = vmatprep.subr.bf16.mxu0 0
        %1095 = vmatpush1.bf16.msra.mxu0 0
        %1096 = vmatprep.subr.bf16.mxu0 0
        %1097 = vmatpush1.bf16.msra.mxu0 0
        %1098 = vmatprep.subr.bf16.mxu0 0
        %1099 = vmatpush1.bf16.msra.mxu0 0
        %1100 = vmatprep.subr.bf16.mxu0 0
        %1101 = vmatpush1.bf16.msra.mxu0 0
        %1102 = vmatprep.subr.bf16.mxu0 0
        %1103 = vmatpush1.bf16.msra.mxu0 %v1086
        %1104 = vmatprep.subr.bf16.mxu0 0
        %1105 = vmatpush2.bf16.msra.mxu0 0
        %1106 = vmatprep.subr.bf16.mxu0 0
        %1107 = vmatpush2.bf16.msra.mxu0 0
        %1108 = vmatprep.subr.bf16.mxu0 0
        %1109 = vmatpush2.bf16.msra.mxu0 0
        %1110 = vmatprep.subr.bf16.mxu0 0
        %1111 = vmatpush2.bf16.msra.mxu0 0
        %1112 = vmatprep.subr.bf16.mxu0 0
        %1113 = vmatpush2.bf16.msra.mxu0 0
        %1114 = vmatprep.subr.bf16.mxu0 0
        %1115 = vmatpush2.bf16.msra.mxu0 0
        %1116 = vmatprep.subr.bf16.mxu0 0
        %1117 = vmatpush2.bf16.msra.mxu0 0
        %1118 = vmatprep.subr.bf16.mxu0 0
        %1119 = vmatpush2.bf16.msra.mxu0 0
        %1120 = vmatprep.mubr.bf16.mxu0 0
        %1121 = vmatmul.mubr.bf16.gmra.mxu0 %v1083
        %v1122 = vpop.f32.mrf.mxu0
        %v1123 = vadd.f32 0.0, %v1122
        %v1124 = vpop.f32.mrf.mxu0
        %v1125 = vpop.f32.mrf.mxu0
        %v1126 = vpop.f32.mrf.mxu0
        %1127 = vdwg.mxu0
        %v1129 = vsel %vm940, %v988, 0
        %v1132 = vsel %vm992, %v745, 0
        %1134 = vmatprep.subr.bf16.mxu0 0
        %1135 = vmatpush1.bf16.msra.mxu0 0
        %1136 = vmatprep.subr.bf16.mxu0 0
        %1137 = vmatpush1.bf16.msra.mxu0 0
        %1138 = vmatprep.subr.bf16.mxu0 0
        %1139 = vmatpush1.bf16.msra.mxu0 0
        %1140 = vmatprep.subr.bf16.mxu0 0
        %1141 = vmatpush1.bf16.msra.mxu0 0
        %1142 = vmatprep.subr.bf16.mxu0 0
        %1143 = vmatpush1.bf16.msra.mxu0 0
        %1144 = vmatprep.subr.bf16.mxu0 0
        %1145 = vmatpush1.bf16.msra.mxu0 0
        %1146 = vmatprep.subr.bf16.mxu0 0
        %1147 = vmatpush1.bf16.msra.mxu0 0
        %1148 = vmatprep.subr.bf16.mxu0 0
        %1149 = vmatpush1.bf16.msra.mxu0 %v1132
        %1150 = vmatprep.subr.bf16.mxu0 0
        %1151 = vmatpush2.bf16.msra.mxu0 0
        %1152 = vmatprep.subr.bf16.mxu0 0
        %1153 = vmatpush2.bf16.msra.mxu0 0
        %1154 = vmatprep.subr.bf16.mxu0 0
        %1155 = vmatpush2.bf16.msra.mxu0 0
        %1156 = vmatprep.subr.bf16.mxu0 0
        %1157 = vmatpush2.bf16.msra.mxu0 0
        %1158 = vmatprep.subr.bf16.mxu0 0
        %1159 = vmatpush2.bf16.msra.mxu0 0
        %1160 = vmatprep.subr.bf16.mxu0 0
        %1161 = vmatpush2.bf16.msra.mxu0 0
        %1162 = vmatprep.subr.bf16.mxu0 0
        %1163 = vmatpush2.bf16.msra.mxu0 0
        %1164 = vmatprep.subr.bf16.mxu0 0
        %1165 = vmatpush2.bf16.msra.mxu0 0
        %1166 = vmatprep.mubr.bf16.mxu0 0
        %1167 = vmatmul.mubr.bf16.gmra.mxu0 %v1129
        %v1168 = vpop.f32.mrf.mxu0
        %v1169 = vadd.f32 0.0, %v1168
        %v1170 = vpop.f32.mrf.mxu0
        %v1171 = vpop.f32.mrf.mxu0
        %v1172 = vpop.f32.mrf.mxu0
        %1173 = vdwg.mxu0
        %1175 = vrot.lane.b32.xlu0 %v1077, 32
        %v1176 = vpop.permute.xlu0 %1175
        %1179 = vrot.lane.b32.xlu0 %v1123, 64
        %v1180 = vpop.permute.xlu0 %1179
        %1183 = vrot.lane.b32.xlu0 %v1169, 96
        %v1184 = vpop.permute.xlu0 %1183
        %v1186 = vsel %vm746, %v1031, %v1176
        %vm1187 = vcmask 523264
        %v1188 = vsel %vm1187, %v1186, %v1180
        %vm1189 = vcmask 785408
        %v1190 = vsel %vm1189, %v1188, %v1184
        %v1191 = vld [vmem:[%s10] sm:$0x3f]
        %v1192 = vpack.c.bf16 %v1190, %v1190
        %v1193 = vld [vmem:[%s4] sm:$0xf]
        %v1194 = vld [vmem:[%s4 + $0x4] sm:$0xf]
        %v1195 = vld [vmem:[%s4 + $0x8] sm:$0xf]
        %v1196 = vld [vmem:[%s4 + $0xc] sm:$0xf]
        %v1197 = vld [vmem:[%s4 + $0x10] sm:$0xf]
        %v1198 = vld [vmem:[%s4 + $0x14] sm:$0xf]
        %v1199 = vld [vmem:[%s4 + $0x18] sm:$0xf]
        %v1200 = vld [vmem:[%s4 + $0x1c] sm:$0xf]
        %v1201 = vld [vmem:[%s4 + $0x20] sm:$0xf]
        %v1202 = vld [vmem:[%s4 + $0x24] sm:$0xf]
        %v1203 = vld [vmem:[%s4 + $0x28] sm:$0xf]
        %v1204 = vld [vmem:[%s4 + $0x2c] sm:$0xf]
        %v1205 = vld [vmem:[%s4 + $0x30] sm:$0xf]
        %v1206 = vld [vmem:[%s4 + $0x34] sm:$0xf]
        %v1207 = vld [vmem:[%s4 + $0x38] sm:$0xf]
        %v1208 = vld [vmem:[%s4 + $0x3c] sm:$0xf]
        %v1209 = vlaneseq
        %v1210 = vshrl.u32 %v1209, 7
        %v1211 = vsub.s32 0, %v1210
        %v1212 = vrot.slane %v1191, %v1211
        %v1229 = vunpack.c.l.b16 %v1193
        %v1230 = vunpack.c.l.b16 %v1194
        %v1231 = vunpack.c.l.b16 %v1195
        %v1232 = vunpack.c.l.b16 %v1196
        %v1233 = vunpack.c.l.b16 %v1197
        %v1234 = vunpack.c.l.b16 %v1198
        %v1235 = vunpack.c.l.b16 %v1199
        %v1236 = vunpack.c.l.b16 %v1200
        %v1237 = vunpack.c.l.b16 %v1201
        %v1238 = vunpack.c.l.b16 %v1202
        %v1239 = vunpack.c.l.b16 %v1203
        %v1240 = vunpack.c.l.b16 %v1204
        %v1241 = vunpack.c.l.b16 %v1205
        %v1242 = vunpack.c.l.b16 %v1206
        %v1243 = vunpack.c.l.b16 %v1207
        %v1244 = vunpack.c.l.b16 %v1208
        %v1245 = vpack.c.b16 %v1230, %v1229
        %v1246 = vpack.c.b16 %v1232, %v1231
        %v1247 = vpack.c.b16 %v1234, %v1233
        %v1248 = vpack.c.b16 %v1236, %v1235
        %v1249 = vpack.c.b16 %v1238, %v1237
        %v1250 = vpack.c.b16 %v1240, %v1239
        %v1251 = vpack.c.b16 %v1242, %v1241
        %v1252 = vpack.c.b16 %v1244, %v1243
        %1261 = vmatprep.subr.bf16.mxu0 0
        %1262 = vmatpush1.bf16.msra.mxu0 %v1252
        %1263 = vmatprep.subr.bf16.mxu0 0
        %1264 = vmatpush1.bf16.msra.mxu0 %v1251
        %1265 = vmatprep.subr.bf16.mxu0 0
        %1266 = vmatpush1.bf16.msra.mxu0 %v1250
        %1267 = vmatprep.subr.bf16.mxu0 0
        %1268 = vmatpush1.bf16.msra.mxu0 %v1249
        %1269 = vmatprep.subr.bf16.mxu0 0
        %1270 = vmatpush1.bf16.msra.mxu0 %v1248
        %1271 = vmatprep.subr.bf16.mxu0 0
        %1272 = vmatpush1.bf16.msra.mxu0 %v1247
        %1273 = vmatprep.subr.bf16.mxu0 0
        %1274 = vmatpush1.bf16.msra.mxu0 %v1246
        %1275 = vmatprep.subr.bf16.mxu0 0
        %1276 = vmatpush1.bf16.msra.mxu0 %v1245
        %1277 = vmatprep.subr.bf16.mxu0 0
        %1278 = vmatpush2.bf16.msra.mxu0 0
        %1279 = vmatprep.subr.bf16.mxu0 0
        %1280 = vmatpush2.bf16.msra.mxu0 0
        %1281 = vmatprep.subr.bf16.mxu0 0
        %1282 = vmatpush2.bf16.msra.mxu0 0
        %1283 = vmatprep.subr.bf16.mxu0 0
        %1284 = vmatpush2.bf16.msra.mxu0 0
        %1285 = vmatprep.subr.bf16.mxu0 0
        %1286 = vmatpush2.bf16.msra.mxu0 0
        %1287 = vmatprep.subr.bf16.mxu0 0
        %1288 = vmatpush2.bf16.msra.mxu0 0
        %1289 = vmatprep.subr.bf16.mxu0 0
        %1290 = vmatpush2.bf16.msra.mxu0 0
        %1291 = vmatprep.subr.bf16.mxu0 0
        %1292 = vmatpush2.bf16.msra.mxu0 0
        %1293 = vmatprep.mubr.bf16.mxu0 0
        %1294 = vmatmul.mubr.bf16.gmra.mxu0 %v1192
        %v1295 = vpop.f32.mrf.mxu0
        %v1296 = vadd.f32 %v1212, %v1295
        %v1297 = vpop.f32.mrf.mxu0
        %v1298 = vpop.f32.mrf.mxu0
        %v1299 = vpop.f32.mrf.mxu0
        %1300 = vdwg.mxu0
        %v1301 = vsel %vm746, %v1296, 0.0
        %1302 = vadd.xlane.f32.xlu0 %v1301
        %v1303 = vpop.xlane.xlu0 %1302
        %v1304 = vrcp.pop 32.0
        %v1305 = vmul.f32 %v1303, %v1304
        %v1306 = vsub.f32 %v1296, %v1305
        %v1307 = vmul.f32 %v1306, %v1306
        %v1308 = vsel %vm746, %v1307, 0.0
        %1309 = vadd.xlane.f32.xlu0 %v1308
        %v1310 = vpop.xlane.xlu0 %1309
        %v1311 = vmul.f32 %v1310, %v1304
        %v1312 = vadd.f32 %v1311, 1e-05
        %v1313 = vrsqrt.pop %v1312
        %v1314 = vmul.f32 %v1306, %v1313
        %v1315 = vlaneseq
        %v1316 = vshrl.u32 %v1315, 7
        %v1317 = vsub.s32 1, %v1316
        %v1318 = vrot.slane %v1191, %v1317
        %v1319 = vmul.f32 %v1314, %v1318
        %v1320 = vlaneseq
        %v1321 = vshrl.u32 %v1320, 7
        %v1322 = vsub.s32 2, %v1321
        %v1323 = vrot.slane %v1191, %v1322
        %v1324 = vadd.f32 %v1319, %v1323
        %v1325 = vpack.c.bf16 %v1324, %v1324
        %v1326 = vld [vmem:[%s5] sm:$0xf]
        %v1327 = vld [vmem:[%s5 + $0x4] sm:$0xf]
        %v1328 = vld [vmem:[%s5 + $0x8] sm:$0xf]
        %v1329 = vld [vmem:[%s5 + $0xc] sm:$0xf]
        %v1330 = vld [vmem:[#allocation5] sm:$0x1]
        %v1332 = vlaneseq
        %v1333 = vshrl.u32 %v1332, 7
        %v1334 = vsub.s32 0, %v1333
        %v1335 = vrot.slane %v1330, %v1334
        %v1341 = vunpack.c.l.b16 %v1326
        %v1342 = vunpack.c.l.b16 %v1327
        %v1343 = vunpack.c.l.b16 %v1328
        %v1344 = vunpack.c.l.b16 %v1329
        %v1345 = vpack.c.b16 %v1342, %v1341
        %v1346 = vpack.c.b16 %v1344, %v1343
        %v1350 = vsel %vm746, %v1325, 0
        %1352 = vmatprep.subr.bf16.mxu0 0
        %1353 = vmatpush1.bf16.msra.mxu0 0
        %1354 = vmatprep.subr.bf16.mxu0 0
        %1355 = vmatpush1.bf16.msra.mxu0 0
        %1356 = vmatprep.subr.bf16.mxu0 0
        %1357 = vmatpush1.bf16.msra.mxu0 0
        %1358 = vmatprep.subr.bf16.mxu0 0
        %1359 = vmatpush1.bf16.msra.mxu0 0
        %1360 = vmatprep.subr.bf16.mxu0 0
        %1361 = vmatpush1.bf16.msra.mxu0 0
        %1362 = vmatprep.subr.bf16.mxu0 0
        %1363 = vmatpush1.bf16.msra.mxu0 0
        %1364 = vmatprep.subr.bf16.mxu0 0
        %1365 = vmatpush1.bf16.msra.mxu0 %v1346
        %1366 = vmatprep.subr.bf16.mxu0 0
        %1367 = vmatpush1.bf16.msra.mxu0 %v1345
        %1368 = vmatprep.subr.bf16.mxu0 0
        %1369 = vmatpush2.bf16.msra.mxu0 0
        %1370 = vmatprep.subr.bf16.mxu0 0
        %1371 = vmatpush2.bf16.msra.mxu0 0
        %1372 = vmatprep.subr.bf16.mxu0 0
        %1373 = vmatpush2.bf16.msra.mxu0 0
        %1374 = vmatprep.subr.bf16.mxu0 0
        %1375 = vmatpush2.bf16.msra.mxu0 0
        %1376 = vmatprep.subr.bf16.mxu0 0
        %1377 = vmatpush2.bf16.msra.mxu0 0
        %1378 = vmatprep.subr.bf16.mxu0 0
        %1379 = vmatpush2.bf16.msra.mxu0 0
        %1380 = vmatprep.subr.bf16.mxu0 0
        %1381 = vmatpush2.bf16.msra.mxu0 0
        %1382 = vmatprep.subr.bf16.mxu0 0
        %1383 = vmatpush2.bf16.msra.mxu0 0
        %1384 = vmatprep.mubr.bf16.mxu0 0
        %1385 = vmatmul.mubr.bf16.gmra.mxu0 %v1350
        %v1386 = vpop.f32.mrf.mxu0
        %v1387 = vadd.f32 %v1335, %v1386
        %v1388 = vpop.f32.mrf.mxu0
        %v1389 = vpop.f32.mrf.mxu0
        %v1390 = vpop.f32.mrf.mxu0
        %1391 = vdwg.mxu0
        %v1392 = vmul.f32 %v1387, 0.5
        %v1393 = vmul.f32 %v1387, 0.70710677
        %vm1394 = vcmp.ge.f32.partialorder %v1393, 0.0
        %v1395 = vsel %vm1394, 1.0, -1.0
        %v1396 = vand.u32 2147483647, %v1393
        %v1397 = vmul.f32 %v1396, 0.3275911
        %v1398 = vadd.f32 %v1397, 1.0
        %v1399 = vrcp.pop %v1398
        %v1400 = vmul.f32 1.0, %v1399
        %v1401 = vmul.f32 %v1400, 1.0614054
        %v1402 = vadd.f32 %v1401, -1.4531521
        %v1403 = vmul.f32 %v1402, %v1400
        %v1404 = vadd.f32 %v1403, 1.4214138
        %v1405 = vmul.f32 %v1404, %v1400
        %v1406 = vadd.f32 %v1405, -0.28449672
        %v1407 = vmul.f32 %v1406, %v1400
        %v1408 = vadd.f32 %v1407, 0.2548296
        %v1409 = vmul.f32 %v1408, %v1400
        %v1410 = vsub.f32 0.0, %v1396
        %v1411 = vmul.f32 %v1410, %v1396
        %v1412 = vmul.f32 %v1411, 1.442695
        %v1413 = vpow.pop %v1412
        %v1414 = vmul.f32 %v1409, %v1413
        %v1415 = vsub.f32 1.0, %v1414
        %v1416 = vmul.f32 %v1395, %v1415
        %v1417 = vadd.f32 %v1416, 1.0
        %v1418 = vmul.f32 %v1392, %v1417
        %v1419 = vpack.c.bf16 %v1418, %v1418
        %v1420 = vld [vmem:[%s7] sm:$0xf]
        %v1421 = vld [vmem:[%s7 + $0x4] sm:$0xf]
        %v1422 = vld [vmem:[%s7 + $0x8] sm:$0xf]
        %v1423 = vld [vmem:[%s7 + $0xc] sm:$0xf]
        %v1424 = vlaneseq
        %v1425 = vshrl.u32 %v1424, 7
        %v1426 = vsub.s32 3, %v1425
        %v1427 = vrot.slane %v1191, %v1426
        %v1432 = vunpack.c.l.b16 %v1420
        %v1433 = vunpack.c.l.b16 %v1421
        %v1434 = vunpack.c.l.b16 %v1422
        %v1435 = vunpack.c.l.b16 %v1423
        %v1436 = vpack.c.b16 %v1433, %v1432
        %v1437 = vpack.c.b16 %v1435, %v1434
        %v1441 = vsel %vm746, %v1419, 0
        %1443 = vmatprep.subr.bf16.mxu0 0
        %1444 = vmatpush1.bf16.msra.mxu0 0
        %1445 = vmatprep.subr.bf16.mxu0 0
        %1446 = vmatpush1.bf16.msra.mxu0 0
        %1447 = vmatprep.subr.bf16.mxu0 0
        %1448 = vmatpush1.bf16.msra.mxu0 0
        %1449 = vmatprep.subr.bf16.mxu0 0
        %1450 = vmatpush1.bf16.msra.mxu0 0
        %1451 = vmatprep.subr.bf16.mxu0 0
        %1452 = vmatpush1.bf16.msra.mxu0 0
        %1453 = vmatprep.subr.bf16.mxu0 0
        %1454 = vmatpush1.bf16.msra.mxu0 0
        %1455 = vmatprep.subr.bf16.mxu0 0
        %1456 = vmatpush1.bf16.msra.mxu0 %v1437
        %1457 = vmatprep.subr.bf16.mxu0 0
        %1458 = vmatpush1.bf16.msra.mxu0 %v1436
        %1459 = vmatprep.subr.bf16.mxu0 0
        %1460 = vmatpush2.bf16.msra.mxu0 0
        %1461 = vmatprep.subr.bf16.mxu0 0
        %1462 = vmatpush2.bf16.msra.mxu0 0
        %1463 = vmatprep.subr.bf16.mxu0 0
        %1464 = vmatpush2.bf16.msra.mxu0 0
        %1465 = vmatprep.subr.bf16.mxu0 0
        %1466 = vmatpush2.bf16.msra.mxu0 0
        %1467 = vmatprep.subr.bf16.mxu0 0
        %1468 = vmatpush2.bf16.msra.mxu0 0
        %1469 = vmatprep.subr.bf16.mxu0 0
        %1470 = vmatpush2.bf16.msra.mxu0 0
        %1471 = vmatprep.subr.bf16.mxu0 0
        %1472 = vmatpush2.bf16.msra.mxu0 0
        %1473 = vmatprep.subr.bf16.mxu0 0
        %1474 = vmatpush2.bf16.msra.mxu0 0
        %1475 = vmatprep.mubr.bf16.mxu0 0
        %1476 = vmatmul.mubr.bf16.gmra.mxu0 %v1441
        %v1477 = vpop.f32.mrf.mxu0
        %v1478 = vadd.f32 %v1427, %v1477
        %v1479 = vpop.f32.mrf.mxu0
        %v1480 = vpop.f32.mrf.mxu0
        %v1481 = vpop.f32.mrf.mxu0
        %1482 = vdwg.mxu0
        %v1483 = vsel %vm746, %v1478, 0.0
        %1484 = vadd.xlane.f32.xlu0 %v1483
        %v1485 = vpop.xlane.xlu0 %1484
        %v1486 = vmul.f32 %v1485, %v1304
        %v1487 = vsub.f32 %v1478, %v1486
        %v1488 = vmul.f32 %v1487, %v1487
        %v1489 = vsel %vm746, %v1488, 0.0
        %1490 = vadd.xlane.f32.xlu0 %v1489
        %v1491 = vpop.xlane.xlu0 %1490
        %v1492 = vmul.f32 %v1491, %v1304
        %v1493 = vadd.f32 %v1492, 1e-05
        %v1494 = vrsqrt.pop %v1493
        %v1495 = vmul.f32 %v1487, %v1494
        %v1496 = vlaneseq
        %v1497 = vshrl.u32 %v1496, 7
        %v1498 = vsub.s32 4, %v1497
        %v1499 = vrot.slane %v1191, %v1498
        %v1500 = vmul.f32 %v1495, %v1499
        %v1501 = vlaneseq
        %v1502 = vshrl.u32 %v1501, 7
        %v1503 = vsub.s32 5, %v1502
        %v1504 = vrot.slane %v1191, %v1503
        %v1505 = vadd.f32 %v1500, %v1504
        %v1506 = vpack.c.bf16 %v1505, %v1505
        %v1507 = vld [vmem:[#allocation7] sm:$0xf]
        %v1508 = vld [vmem:[#allocation7 + $0x4] sm:$0xf]
        %v1509 = vld [vmem:[#allocation7 + $0x8] sm:$0xf]
        %v1510 = vld [vmem:[#allocation7 + $0xc] sm:$0xf]
        %v1511 = vld [vmem:[#allocation8] sm:$0x1]
        %v1513 = vlaneseq
        %v1514 = vshrl.u32 %v1513, 7
        %v1515 = vsub.s32 0, %v1514
        %v1516 = vrot.slane %v1511, %v1515
        %v1522 = vunpack.c.l.b16 %v1507
        %v1523 = vunpack.c.l.b16 %v1508
        %v1524 = vunpack.c.l.b16 %v1509
        %v1525 = vunpack.c.l.b16 %v1510
        %v1526 = vpack.c.b16 %v1523, %v1522
        %v1527 = vpack.c.b16 %v1525, %v1524
        %v1531 = vsel %vm746, %v1506, 0
        %1533 = vmatprep.subr.bf16.mxu0 0
        %1534 = vmatpush1.bf16.msra.mxu0 0
        %1535 = vmatprep.subr.bf16.mxu0 0
        %1536 = vmatpush1.bf16.msra.mxu0 0
        %1537 = vmatprep.subr.bf16.mxu0 0
        %1538 = vmatpush1.bf16.msra.mxu0 0
        %1539 = vmatprep.subr.bf16.mxu0 0
        %1540 = vmatpush1.bf16.msra.mxu0 0
        %1541 = vmatprep.subr.bf16.mxu0 0
        %1542 = vmatpush1.bf16.msra.mxu0 0
        %1543 = vmatprep.subr.bf16.mxu0 0
        %1544 = vmatpush1.bf16.msra.mxu0 0
        %1545 = vmatprep.subr.bf16.mxu0 0
        %1546 = vmatpush1.bf16.msra.mxu0 %v1527
        %1547 = vmatprep.subr.bf16.mxu0 0
        %1548 = vmatpush1.bf16.msra.mxu0 %v1526
        %1549 = vmatprep.subr.bf16.mxu0 0
        %1550 = vmatpush2.bf16.msra.mxu0 0
        %1551 = vmatprep.subr.bf16.mxu0 0
        %1552 = vmatpush2.bf16.msra.mxu0 0
        %1553 = vmatprep.subr.bf16.mxu0 0
        %1554 = vmatpush2.bf16.msra.mxu0 0
        %1555 = vmatprep.subr.bf16.mxu0 0
        %1556 = vmatpush2.bf16.msra.mxu0 0
        %1557 = vmatprep.subr.bf16.mxu0 0
        %1558 = vmatpush2.bf16.msra.mxu0 0
        %1559 = vmatprep.subr.bf16.mxu0 0
        %1560 = vmatpush2.bf16.msra.mxu0 0
        %1561 = vmatprep.subr.bf16.mxu0 0
        %1562 = vmatpush2.bf16.msra.mxu0 0
        %1563 = vmatprep.subr.bf16.mxu0 0
        %1564 = vmatpush2.bf16.msra.mxu0 0
        %1565 = vmatprep.mubr.bf16.mxu0 0
        %1566 = vmatmul.mubr.bf16.gmra.mxu0 %v1531
        %v1567 = vpop.f32.mrf.mxu0
        %v1568 = vadd.f32 %v1516, %v1567
        %v1569 = vpop.f32.mrf.mxu0
        %v1570 = vpop.f32.mrf.mxu0
        %v1571 = vpop.f32.mrf.mxu0
        %1572 = vdwg.mxu0
        %1573 = vmax.xlane.f32.xlu0 %v1568
        %v1574 = vpop.xlane.xlu0 %1573
        %v1575 = vsub.f32 %v1568, %v1574
        %v1576 = vmul.f32 %v1575, 1.442695
        %v1577 = vpow.pop %v1576
        %1578 = vadd.xlane.f32.xlu0 %v1577
        %v1579 = vpop.xlane.xlu0 %1578
        %v1580 = vlog2.pop %v1579
        %v1581 = vmul.f32 %v1580, 0.6931472
        %v1582 = vsub.f32 %v1575, %v1581
        %1583 = vst [vmem:[%s445] sm:$0xff] %v1582
        %s1584 = sand.u32 %s277, 1
        %s1585 = scalar_lea.sflag [#allocation4], %s1584
        %s1586 = sand.u32 %s277, 1
        %s1587 = smul.addr %s1586, 8
        %s1588 = scalar_lea.vmem [#allocation10], %s1587
        // Predicated region
        $region81: #{tpu_custom_call.1} parent=63 // pred_check
          %p1589 = pneg %p287
        $region82: #{tpu_custom_call.1} parent=63 // pred_check_branch
          %1591 = sbr.rel (%p1589) target = $region84
        $region83: #{tpu_custom_call.1} parent=63 // pred_region
          %s1593 = ssub.s32 128, 128
          %1594 = vsyncadd %s1585, %s1593
          %s1595 = smul.addr %s28, 128
          %s1596 = scalar_lea.hbm %s11, %s1595
          %s1598 = sshll.u32 %s1588, 4
          %s1599 = int_to_ptr.vmem [resolvable:$true] %s1598
          %1601 = dma.vmem_to_hbm [thread:$0]  %s1599, 128, %s1596, %s1585
        $region84: #{tpu_custom_call.1} parent=63 // pred_fallthru
          _
      $region64: #{tpu_custom_call.1} parent=5 // pred_fallthru
        _
      %p1602 = scmp.le.s32.totalorder 2, %s23
      // Predicated region
      $region85: #{tpu_custom_call.1} parent=5 // pred_check
        %p1603 = pneg %p1602
      $region86: #{tpu_custom_call.1} parent=5 // pred_check_branch
        %1605 = sbr.rel (%p1603) target = $region88
      $region87: #{tpu_custom_call.1} parent=5 // pred_region
        %s1606 = ssub.s32 %s23, 2
        // Predicated region
        $region89: #{tpu_custom_call.1} parent=87 // pred_check
          %p1607 = pneg %p293
        $region90: #{tpu_custom_call.1} parent=87 // pred_check_branch
          %1609 = sbr.rel (%p1607) target = $region92
        $region91: #{tpu_custom_call.1} parent=87 // pred_region
          %s1610 = sand.u32 %s278, 1
          %s1611 = scalar_lea.sflag [#allocation4], %s1610
          %s1612 = sand.u32 %s278, 1
          %s1613 = smul.addr %s1612, 8
          %s1614 = scalar_lea.vmem [#allocation10], %s1613
          %1615 = dma.done %s1611, 128
        $region92: #{tpu_custom_call.1} parent=87 // pred_fallthru
          _
      $region88: #{tpu_custom_call.1} parent=5 // pred_fallthru
        _
    $region6: #{tpu_custom_call.1} parent=1 // loop_footer
      %s27 = sadd.s32 1, %s23
    $region7: #{tpu_custom_call.1} parent=1 // loop_footer_branch
      %22 = sbr.rel target = $region3
    $region8: #{tpu_custom_call.1} parent=1 // loop_exit
      _
    %1616 = vsyncpa [#allocation3], 1
    %s1617 = scalar_lea.sflag [#allocation3], 1
    %1618 = vsyncpa %s1617, 1
    %1619 = vsyncpa [#allocation6], 1
    %1620 = vsyncpa [#allocation9], 1
    %1621 = vsyncpa [#allocation4], 1
    %s1622 = scalar_lea.sflag [#allocation4], 1
    %1623 = vsyncpa %s1622, 1

</llo_original>
